<compile_context>
chip_gen: v6e
topology: v6e:2x2x1
jax: 0.10.0
libtpu: 0.0.40
codegen_flags: <defaults>
</compile_context>

<pallas_src>
import functools

import jax
import jax.numpy as jnp
from jax import lax
from jax.experimental import pallas as pl
from jax.experimental.pallas import tpu as pltpu


def _round_up(x, m):
    return (x + m - 1) // m * m


def _lstm_recurrence_kernel(preact_ref, whh_ref, out_ref, cn_ref,
                            h_sc, c_sc, *, seq_len, t_chunk, mask_tail):
    """One grid step = one (batch-tile, time-chunk).

    preact_ref: (Tc, Bt, 4*Hp) f32   precomputed x_t @ W_ih^T
    whh_ref:    (Hp, 4*Hp)     bf16  resident recurrent weight (transposed)
    out_ref:    (Tc, Bt, Hp)   f32   hidden states for this chunk
    cn_ref:     (1, Bt, Hp)    f32   final cell state (resident across time)
    h_sc, c_sc: (Bt, Hp)       f32   recurrent carry
    """
    tc_idx = pl.program_id(1)          # time-chunk index (inner, sequential)
    Hp = h_sc.shape[-1]

    @pl.when(tc_idx == 0)
    def _():
        h_sc[...] = jnp.zeros_like(h_sc)
        c_sc[...] = jnp.zeros_like(c_sc)

    whh = whh_ref[...]                 # hoisted once per chunk (bf16, resident)

    def step(i, carry):
        h_prev = h_sc[...]
        c_prev = c_sc[...]
        # Recurrent matmul: bf16 operands, f32 accumulate (MXU native rate).
        gates = preact_ref[i] + jnp.dot(
            h_prev.astype(jnp.bfloat16), whh,
            preferred_element_type=jnp.float32)            # (Bt, 4Hp) f32
        # PyTorch gate order [i | f | g | o]; Hp is a multiple of 128 so each
        # slice is lane-aligned (whole vregs, pure VPU+EUP path).
        i_g = jax.nn.sigmoid(gates[:, 0 * Hp:1 * Hp])
        f_g = jax.nn.sigmoid(gates[:, 1 * Hp:2 * Hp])
        g_g = jnp.tanh(gates[:, 2 * Hp:3 * Hp])
        o_g = jax.nn.sigmoid(gates[:, 3 * Hp:4 * Hp])
        c_new = f_g * c_prev + i_g * g_g
        h_new = o_g * jnp.tanh(c_new)
        if mask_tail:
            # Only for the padded tail chunk when T % Tc != 0.
            valid = (tc_idx * t_chunk + i) < seq_len
            c_new = jnp.where(valid, c_new, c_prev)
            h_new = jnp.where(valid, h_new, h_prev)
        c_sc[...] = c_new
        h_sc[...] = h_new
        out_ref[i] = h_new.astype(out_ref.dtype)
        return carry

    lax.fori_loop(0, t_chunk, step, 0, unroll=True)

    @pl.when(tc_idx == pl.num_programs(1) - 1)
    def _():
        cn_ref[0] = c_sc[...].astype(cn_ref.dtype)


def lstm_forward(x, w_ih, w_hh, *, t_chunk=8):
    """x: (T, B, I) f32; w_ih: (4H, I); w_hh: (4H, H).
    Returns (out, (h_n, c_n)) with out: (T, B, H), h_n/c_n: (1, B, H)."""
    T, B, I = x.shape
    H = w_hh.shape[1]
    assert w_ih.shape == (4 * H, I) and w_hh.shape == (4 * H, H)

    f32, bf16 = jnp.float32, jnp.bfloat16

    Hp = _round_up(H, 128)             # lane-align each gate block
    Bp = _round_up(B, 8)               # sublane-align batch
    # Independent batch tiles -> "parallel" axis (2nd TensorCore on v7x).
    n_btiles = 2 if (Bp >= 16 and Bp % 16 == 0) else 1
    Bt = Bp // n_btiles
    Tc = max(1, min(t_chunk, T))
    Tp = _round_up(T, Tc)
    n_tchunks = Tp // Tc
    mask_tail = Tp != T

    # ---- per-gate padding so [i|f|g|o] blocks stay lane aligned -------------
    def pad_gate_weight(w, in_dim, in_pad):
        w4 = w.reshape(4, H, in_dim).astype(f32)
        w4 = jnp.pad(w4, ((0, 0), (0, Hp - H), (0, in_pad - in_dim)))
        return w4.reshape(4 * Hp, in_pad)

    wih_p = pad_gate_weight(w_ih, I, I)        # (4Hp, I)
    whh_p = pad_gate_weight(w_hh, H, Hp)       # (4Hp, Hp)

    # ---- hoist the input projection: one big matmul over all T steps --------
    x_p = jnp.pad(x.astype(f32), ((0, Tp - T), (0, Bp - B), (0, 0)))
    preact = jnp.einsum(
        "tbi,gi->tbg", x_p.astype(bf16), wih_p.astype(bf16),
        preferred_element_type=f32)            # (Tp, Bp, 4Hp) f32

    whh_t = jnp.transpose(whh_p).astype(bf16)  # (Hp, 4Hp), resident in VMEM

    kernel = functools.partial(
        _lstm_recurrence_kernel,
        seq_len=T, t_chunk=Tc, mask_tail=mask_tail)

    out_p, cn_p = pl.pallas_call(
        kernel,
        out_shape=(
            jax.ShapeDtypeStruct((Tp, Bp, Hp), f32),   # hidden states
            jax.ShapeDtypeStruct((1, Bp, Hp), f32),    # final cell state
        ),
        grid_spec=pltpu.PrefetchScalarGridSpec(
            num_scalar_prefetch=0,
            grid=(n_btiles, n_tchunks),                # (parallel, sequential)
            in_specs=[
                pl.BlockSpec((Tc, Bt, 4 * Hp), lambda b, t: (t, b, 0)),
                pl.BlockSpec((Hp, 4 * Hp), lambda b, t: (0, 0)),
            ],
            out_specs=[
                pl.BlockSpec((Tc, Bt, Hp), lambda b, t: (t, b, 0)),
                pl.BlockSpec((1, Bt, Hp), lambda b, t: (0, b, 0)),
            ],
            scratch_shapes=[
                pltpu.VMEM((Bt, Hp), f32),             # h carry
                pltpu.VMEM((Bt, Hp), f32),             # c carry
            ],
        ),
        compiler_params=pltpu.CompilerParams(
            dimension_semantics=("parallel", "arbitrary"),
            vmem_limit_bytes=48 * 1024 * 1024),
    )(preact, whh_t)

    out = out_p[:T, :B, :H]
    c_n = cn_p[:, :B, :H]
    h_n = out[T - 1:T]                 # h_n == last output row
    return out, (h_n, c_n)


# --------------------------- references (validation) -------------------------
def _lstm_reference_f32(x, w_ih, w_hh):
    """Pure-f32 lax.scan reference (PyTorch _VF.lstm semantics)."""
    _, B, _ = x.shape
    H = w_hh.shape[1]
    wih_t = w_ih.T
    whh_t = w_hh.T

    def step(carry, x_t):
        h, c = carry
        gates = x_t @ wih_t + h @ whh_t
        i = jax.nn.sigmoid(gates[:, 0 * H:1 * H])
        f = jax.nn.sigmoid(gates[:, 1 * H:2 * H])
        g = jnp.tanh(gates[:, 2 * H:3 * H])
        o = jax.nn.sigmoid(gates[:, 3 * H:4 * H])
        c_new = f * c + i * g
        h_new = o * jnp.tanh(c_new)
        return (h_new, c_new), h_new

    init = (jnp.zeros((B, H), jnp.float32), jnp.zeros((B, H), jnp.float32))
    (h_n, c_n), out = lax.scan(step, init, x)
    return out, (h_n[None], c_n[None])


def _lstm_reference_bf16(x, w_ih, w_hh):
    """Reference with the kernel's numerics: bf16 matmul operands, f32
    accumulation, f32 elementwise math and f32 h/c carry."""
    _, B, _ = x.shape
    H = w_hh.shape[1]
    wih_bt = w_ih.T.astype(jnp.bfloat16)
    whh_bt = w_hh.T.astype(jnp.bfloat16)
    preact = jnp.einsum("tbi,ig->tbg", x.astype(jnp.bfloat16), wih_bt,
                        preferred_element_type=jnp.float32)

    def step(carry, p_t):
        h, c = carry
        gates = p_t + jnp.dot(h.astype(jnp.bfloat16), whh_bt,
                              preferred_element_type=jnp.float32)
        i = jax.nn.sigmoid(gates[:, 0 * H:1 * H])
        f = jax.nn.sigmoid(gates[:, 1 * H:2 * H])
        g = jnp.tanh(gates[:, 2 * H:3 * H])
        o = jax.nn.sigmoid(gates[:, 3 * H:4 * H])
        c_new = f * c + i * g
        h_new = o * jnp.tanh(c_new)
        return (h_new, c_new), h_new

    init = (jnp.zeros((B, H), jnp.float32), jnp.zeros((B, H), jnp.float32))
    (h_n, c_n), out = lax.scan(step, init, preact)
    return out, (h_n[None], c_n[None])


if __name__ == "__main__":
    # Shapes consistent with the module's forward: x is (seq, batch, input_size).
    T, B, I, H = 8, 4, 16, 32

    key = jax.random.PRNGKey(0)
    k_x, k_hi, k_hh = jax.random.split(key, 3)

    x = jax.random.normal(k_x, (T, B, I), dtype=jnp.float32)
    # torch.rand -> uniform[0, 1)
    w_ih = jax.random.uniform(k_hi, (4 * H, I), dtype=jnp.float32)   # hi_w
    w_hh = jax.random.uniform(k_hh, (4 * H, H), dtype=jnp.float32)   # hh_w

    out, (h_n, c_n) = lstm_forward(x, w_ih, w_hh)
    jax.block_until_ready(out)
    jax.block_until_ready(h_n)
    jax.block_until_ready(c_n)

    # 1) Precision-matched reference (same bf16-operand / f32-accumulate recipe).
    out_m, (h_m, c_m) = _lstm_reference_bf16(x, w_ih, w_hh)
    assert jnp.allclose(out, out_m, atol=2e-3, rtol=2e-3)
    assert jnp.allclose(h_n, h_m, atol=2e-3, rtol=2e-3)
    assert jnp.allclose(c_n, c_m, atol=2e-3, rtol=2e-3)

    # 2) Full-f32 reference (PyTorch semantics); loose tolerance accounts for
    #    the bf16 matmul operands used on the MXU.
    out_f, (h_f, c_f) = _lstm_reference_f32(x, w_ih, w_hh)
    assert jnp.allclose(out, out_f, atol=1.5e-1, rtol=1.5e-1)

    print("KERNEL_OK")
</pallas_src>

<mosaic_0001>
module attributes {stable_mosaic.version = 11 : i64} {
  func.func @_lstm_recurrence_kernel(%arg0: i32, %arg1: i32, %arg2: memref<8x8x512xf32, #tpu.memory_space<vmem>>, %arg3: memref<128x512xbf16, #tpu.memory_space<vmem>>, %arg4: memref<8x8x128xf32, #tpu.memory_space<vmem>>, %arg5: memref<1x8x128xf32, #tpu.memory_space<vmem>>, %arg6: memref<8x128xf32, #tpu.memory_space<vmem>>, %arg7: memref<8x128xf32, #tpu.memory_space<vmem>>) attributes {dimension_semantics = [#tpu.dimension_semantics<parallel>, #tpu.dimension_semantics<arbitrary>], iteration_bounds = array<i64: 1, 1>, scalar_prefetch = 0 : i64, scratch_operands = 2 : i64, tpu.core_type = #tpu.core_type<tc>, window_params = [{transform_indices = @transform_0, window_bounds = array<i64: 8, 8, 512>}, {pipeline_mode = #tpu.pipeline_mode<synchronous>, transform_indices = @transform_1, window_bounds = array<i64: 128, 512>}, {transform_indices = @transform_2, window_bounds = array<i64: 8, 8, 128>}, {transform_indices = @transform_3, window_bounds = array<i64: 1, 8, 128>}]} {
    %c0_i32 = arith.constant 0 : i32
    %0 = arith.cmpi eq, %arg1, %c0_i32 : i32
    %1 = arith.extui %0 : i1 to i32
    %c0_i32_0 = arith.constant 0 : i32
    %2 = arith.cmpi ne, %1, %c0_i32_0 : i32
    scf.if %2 {
      %cst_132 = arith.constant 0.000000e+00 : f32
      %319 = vector.broadcast %cst_132 : f32 to vector<8x128xf32>
      %c0_133 = arith.constant 0 : index
      %c0_134 = arith.constant 0 : index
      %320 = vector.load %arg6[%c0_133, %c0_134] : memref<8x128xf32, #tpu.memory_space<vmem>>, vector<8x128xf32>
      tpu.vector_store %arg6[%c0_133, %c0_134], %319 {strides = array<i32>} : memref<8x128xf32, #tpu.memory_space<vmem>>, vector<8x128xf32>,
      %cst_135 = arith.constant 0.000000e+00 : f32
      %321 = vector.broadcast %cst_135 : f32 to vector<8x128xf32>
      %c0_136 = arith.constant 0 : index
      %c0_137 = arith.constant 0 : index
      %322 = vector.load %arg7[%c0_136, %c0_137] : memref<8x128xf32, #tpu.memory_space<vmem>>, vector<8x128xf32>
      tpu.vector_store %arg7[%c0_136, %c0_137], %321 {strides = array<i32>} : memref<8x128xf32, #tpu.memory_space<vmem>>, vector<8x128xf32>,
    } else {
    }
    %c0 = arith.constant 0 : index
    %c0_1 = arith.constant 0 : index
    %3 = vector.load %arg3[%c0, %c0_1] : memref<128x512xbf16, #tpu.memory_space<vmem>>, vector<128x512xbf16>
    %c0_i32_2 = arith.constant 0 : i32
    %c0_3 = arith.constant 0 : index
    %c0_4 = arith.constant 0 : index
    %4 = vector.load %arg6[%c0_3, %c0_4] : memref<8x128xf32, #tpu.memory_space<vmem>>, vector<8x128xf32>
    %c0_5 = arith.constant 0 : index
    %c0_6 = arith.constant 0 : index
    %5 = vector.load %arg7[%c0_5, %c0_6] : memref<8x128xf32, #tpu.memory_space<vmem>>, vector<8x128xf32>
    %6 = arith.index_cast %c0_i32_2 : i32 to index
    %c0_7 = arith.constant 0 : index
    %c0_8 = arith.constant 0 : index
    %7 = vector.load %arg2[%6, %c0_7, %c0_8] : memref<8x8x512xf32, #tpu.memory_space<vmem>>, vector<1x8x512xf32>
    %8 = vector.shape_cast %7 : vector<1x8x512xf32> to vector<8x512xf32>
    %9 = arith.truncf %4 : vector<8x128xf32> to vector<8x128xbf16>
    %cst = arith.constant dense<0.000000e+00> : vector<8x512xf32>
    %10 = tpu.matmul %9, %3, %cst {dimension_numbers = #tpu.dot_dimension_numbers<[1], [0], [0], [1], [0, 0, 1, 1], [], []>} : vector<8x128xbf16>, vector<128x512xbf16>, vector<8x512xf32> -> vector<8x512xf32>
    %11 = arith.addf %8, %10 : vector<8x512xf32>
    %12 = vector.extract_strided_slice %11 {offsets = [0, 0], sizes = [8, 128], strides = [1, 1]} : vector<8x512xf32> to vector<8x128xf32>
    %13 = arith.negf %12 : vector<8x128xf32>
    %14 = math.exp %13 : vector<8x128xf32>
    %cst_9 = arith.constant 1.000000e+00 : f32
    %15 = vector.broadcast %cst_9 : f32 to vector<8x128xf32>
    %16 = arith.addf %15, %14 : vector<8x128xf32>
    %17 = arith.divf %15, %16 : vector<8x128xf32>
    %18 = vector.extract_strided_slice %11 {offsets = [0, 128], sizes = [8, 128], strides = [1, 1]} : vector<8x512xf32> to vector<8x128xf32>
    %19 = arith.negf %18 : vector<8x128xf32>
    %20 = math.exp %19 : vector<8x128xf32>
    %cst_10 = arith.constant 1.000000e+00 : f32
    %21 = vector.broadcast %cst_10 : f32 to vector<8x128xf32>
    %22 = arith.addf %21, %20 : vector<8x128xf32>
    %23 = arith.divf %21, %22 : vector<8x128xf32>
    %24 = vector.extract_strided_slice %11 {offsets = [0, 256], sizes = [8, 128], strides = [1, 1]} : vector<8x512xf32> to vector<8x128xf32>
    %25 = math.tanh %24 : vector<8x128xf32>
    %26 = vector.extract_strided_slice %11 {offsets = [0, 384], sizes = [8, 128], strides = [1, 1]} : vector<8x512xf32> to vector<8x128xf32>
    %27 = arith.negf %26 : vector<8x128xf32>
    %28 = math.exp %27 : vector<8x128xf32>
    %cst_11 = arith.constant 1.000000e+00 : f32
    %29 = vector.broadcast %cst_11 : f32 to vector<8x128xf32>
    %30 = arith.addf %29, %28 : vector<8x128xf32>
    %31 = arith.divf %29, %30 : vector<8x128xf32>
    %32 = arith.mulf %23, %5 : vector<8x128xf32>
    %33 = arith.mulf %17, %25 : vector<8x128xf32>
    %34 = arith.addf %32, %33 : vector<8x128xf32>
    %35 = math.tanh %34 : vector<8x128xf32>
    %36 = arith.mulf %31, %35 : vector<8x128xf32>
    %c0_12 = arith.constant 0 : index
    %c0_13 = arith.constant 0 : index
    %37 = vector.load %arg7[%c0_12, %c0_13] : memref<8x128xf32, #tpu.memory_space<vmem>>, vector<8x128xf32>
    tpu.vector_store %arg7[%c0_12, %c0_13], %34 {strides = array<i32>} : memref<8x128xf32, #tpu.memory_space<vmem>>, vector<8x128xf32>,
    %c0_14 = arith.constant 0 : index
    %c0_15 = arith.constant 0 : index
    %38 = vector.load %arg6[%c0_14, %c0_15] : memref<8x128xf32, #tpu.memory_space<vmem>>, vector<8x128xf32>
    tpu.vector_store %arg6[%c0_14, %c0_15], %36 {strides = array<i32>} : memref<8x128xf32, #tpu.memory_space<vmem>>, vector<8x128xf32>,
    %39 = arith.index_cast %c0_i32_2 : i32 to index
    %c0_16 = arith.constant 0 : index
    %c0_17 = arith.constant 0 : index
    %40 = vector.load %arg4[%39, %c0_16, %c0_17] : memref<8x8x128xf32, #tpu.memory_space<vmem>>, vector<1x8x128xf32>
    %41 = vector.shape_cast %40 : vector<1x8x128xf32> to vector<8x128xf32>
    %42 = vector.shape_cast %36 : vector<8x128xf32> to vector<1x8x128xf32>
    tpu.vector_store %arg4[%39, %c0_16, %c0_17], %42 {strides = array<i32>} : memref<8x8x128xf32, #tpu.memory_space<vmem>>, vector<1x8x128xf32>,
    %c1_i32 = arith.constant 1 : i32
    %c0_18 = arith.constant 0 : index
    %c0_19 = arith.constant 0 : index
    %43 = vector.load %arg6[%c0_18, %c0_19] : memref<8x128xf32, #tpu.memory_space<vmem>>, vector<8x128xf32>
    %c0_20 = arith.constant 0 : index
    %c0_21 = arith.constant 0 : index
    %44 = vector.load %arg7[%c0_20, %c0_21] : memref<8x128xf32, #tpu.memory_space<vmem>>, vector<8x128xf32>
    %45 = arith.index_cast %c1_i32 : i32 to index
    %c0_22 = arith.constant 0 : index
    %c0_23 = arith.constant 0 : index
    %46 = vector.load %arg2[%45, %c0_22, %c0_23] : memref<8x8x512xf32, #tpu.memory_space<vmem>>, vector<1x8x512xf32>
    %47 = vector.shape_cast %46 : vector<1x8x512xf32> to vector<8x512xf32>
    %48 = arith.truncf %43 : vector<8x128xf32> to vector<8x128xbf16>
    %cst_24 = arith.constant dense<0.000000e+00> : vector<8x512xf32>
    %49 = tpu.matmul %48, %3, %cst_24 {dimension_numbers = #tpu.dot_dimension_numbers<[1], [0], [0], [1], [0, 0, 1, 1], [], []>} : vector<8x128xbf16>, vector<128x512xbf16>, vector<8x512xf32> -> vector<8x512xf32>
    %50 = arith.addf %47, %49 : vector<8x512xf32>
    %51 = vector.extract_strided_slice %50 {offsets = [0, 0], sizes = [8, 128], strides = [1, 1]} : vector<8x512xf32> to vector<8x128xf32>
    %52 = arith.negf %51 : vector<8x128xf32>
    %53 = math.exp %52 : vector<8x128xf32>
    %cst_25 = arith.constant 1.000000e+00 : f32
    %54 = vector.broadcast %cst_25 : f32 to vector<8x128xf32>
    %55 = arith.addf %54, %53 : vector<8x128xf32>
    %56 = arith.divf %54, %55 : vector<8x128xf32>
    %57 = vector.extract_strided_slice %50 {offsets = [0, 128], sizes = [8, 128], strides = [1, 1]} : vector<8x512xf32> to vector<8x128xf32>
    %58 = arith.negf %57 : vector<8x128xf32>
    %59 = math.exp %58 : vector<8x128xf32>
    %cst_26 = arith.constant 1.000000e+00 : f32
    %60 = vector.broadcast %cst_26 : f32 to vector<8x128xf32>
    %61 = arith.addf %60, %59 : vector<8x128xf32>
    %62 = arith.divf %60, %61 : vector<8x128xf32>
    %63 = vector.extract_strided_slice %50 {offsets = [0, 256], sizes = [8, 128], strides = [1, 1]} : vector<8x512xf32> to vector<8x128xf32>
    %64 = math.tanh %63 : vector<8x128xf32>
    %65 = vector.extract_strided_slice %50 {offsets = [0, 384], sizes = [8, 128], strides = [1, 1]} : vector<8x512xf32> to vector<8x128xf32>
    %66 = arith.negf %65 : vector<8x128xf32>
    %67 = math.exp %66 : vector<8x128xf32>
    %cst_27 = arith.constant 1.000000e+00 : f32
    %68 = vector.broadcast %cst_27 : f32 to vector<8x128xf32>
    %69 = arith.addf %68, %67 : vector<8x128xf32>
    %70 = arith.divf %68, %69 : vector<8x128xf32>
    %71 = arith.mulf %62, %44 : vector<8x128xf32>
    %72 = arith.mulf %56, %64 : vector<8x128xf32>
    %73 = arith.addf %71, %72 : vector<8x128xf32>
    %74 = math.tanh %73 : vector<8x128xf32>
    %75 = arith.mulf %70, %74 : vector<8x128xf32>
    %c0_28 = arith.constant 0 : index
    %c0_29 = arith.constant 0 : index
    %76 = vector.load %arg7[%c0_28, %c0_29] : memref<8x128xf32, #tpu.memory_space<vmem>>, vector<8x128xf32>
    tpu.vector_store %arg7[%c0_28, %c0_29], %73 {strides = array<i32>} : memref<8x128xf32, #tpu.memory_space<vmem>>, vector<8x128xf32>,
    %c0_30 = arith.constant 0 : index
    %c0_31 = arith.constant 0 : index
    %77 = vector.load %arg6[%c0_30, %c0_31] : memref<8x128xf32, #tpu.memory_space<vmem>>, vector<8x128xf32>
    tpu.vector_store %arg6[%c0_30, %c0_31], %75 {strides = array<i32>} : memref<8x128xf32, #tpu.memory_space<vmem>>, vector<8x128xf32>,
    %78 = arith.index_cast %c1_i32 : i32 to index
    %c0_32 = arith.constant 0 : index
    %c0_33 = arith.constant 0 : index
    %79 = vector.load %arg4[%78, %c0_32, %c0_33] : memref<8x8x128xf32, #tpu.memory_space<vmem>>, vector<1x8x128xf32>
    %80 = vector.shape_cast %79 : vector<1x8x128xf32> to vector<8x128xf32>
    %81 = vector.shape_cast %75 : vector<8x128xf32> to vector<1x8x128xf32>
    tpu.vector_store %arg4[%78, %c0_32, %c0_33], %81 {strides = array<i32>} : memref<8x8x128xf32, #tpu.memory_space<vmem>>, vector<1x8x128xf32>,
    %c2_i32 = arith.constant 2 : i32
    %c0_34 = arith.constant 0 : index
    %c0_35 = arith.constant 0 : index
    %82 = vector.load %arg6[%c0_34, %c0_35] : memref<8x128xf32, #tpu.memory_space<vmem>>, vector<8x128xf32>
    %c0_36 = arith.constant 0 : index
    %c0_37 = arith.constant 0 : index
    %83 = vector.load %arg7[%c0_36, %c0_37] : memref<8x128xf32, #tpu.memory_space<vmem>>, vector<8x128xf32>
    %84 = arith.index_cast %c2_i32 : i32 to index
    %c0_38 = arith.constant 0 : index
    %c0_39 = arith.constant 0 : index
    %85 = vector.load %arg2[%84, %c0_38, %c0_39] : memref<8x8x512xf32, #tpu.memory_space<vmem>>, vector<1x8x512xf32>
    %86 = vector.shape_cast %85 : vector<1x8x512xf32> to vector<8x512xf32>
    %87 = arith.truncf %82 : vector<8x128xf32> to vector<8x128xbf16>
    %cst_40 = arith.constant dense<0.000000e+00> : vector<8x512xf32>
    %88 = tpu.matmul %87, %3, %cst_40 {dimension_numbers = #tpu.dot_dimension_numbers<[1], [0], [0], [1], [0, 0, 1, 1], [], []>} : vector<8x128xbf16>, vector<128x512xbf16>, vector<8x512xf32> -> vector<8x512xf32>
    %89 = arith.addf %86, %88 : vector<8x512xf32>
    %90 = vector.extract_strided_slice %89 {offsets = [0, 0], sizes = [8, 128], strides = [1, 1]} : vector<8x512xf32> to vector<8x128xf32>
    %91 = arith.negf %90 : vector<8x128xf32>
    %92 = math.exp %91 : vector<8x128xf32>
    %cst_41 = arith.constant 1.000000e+00 : f32
    %93 = vector.broadcast %cst_41 : f32 to vector<8x128xf32>
    %94 = arith.addf %93, %92 : vector<8x128xf32>
    %95 = arith.divf %93, %94 : vector<8x128xf32>
    %96 = vector.extract_strided_slice %89 {offsets = [0, 128], sizes = [8, 128], strides = [1, 1]} : vector<8x512xf32> to vector<8x128xf32>
    %97 = arith.negf %96 : vector<8x128xf32>
    %98 = math.exp %97 : vector<8x128xf32>
    %cst_42 = arith.constant 1.000000e+00 : f32
    %99 = vector.broadcast %cst_42 : f32 to vector<8x128xf32>
    %100 = arith.addf %99, %98 : vector<8x128xf32>
    %101 = arith.divf %99, %100 : vector<8x128xf32>
    %102 = vector.extract_strided_slice %89 {offsets = [0, 256], sizes = [8, 128], strides = [1, 1]} : vector<8x512xf32> to vector<8x128xf32>
    %103 = math.tanh %102 : vector<8x128xf32>
    %104 = vector.extract_strided_slice %89 {offsets = [0, 384], sizes = [8, 128], strides = [1, 1]} : vector<8x512xf32> to vector<8x128xf32>
    %105 = arith.negf %104 : vector<8x128xf32>
    %106 = math.exp %105 : vector<8x128xf32>
    %cst_43 = arith.constant 1.000000e+00 : f32
    %107 = vector.broadcast %cst_43 : f32 to vector<8x128xf32>
    %108 = arith.addf %107, %106 : vector<8x128xf32>
    %109 = arith.divf %107, %108 : vector<8x128xf32>
    %110 = arith.mulf %101, %83 : vector<8x128xf32>
    %111 = arith.mulf %95, %103 : vector<8x128xf32>
    %112 = arith.addf %110, %111 : vector<8x128xf32>
    %113 = math.tanh %112 : vector<8x128xf32>
    %114 = arith.mulf %109, %113 : vector<8x128xf32>
    %c0_44 = arith.constant 0 : index
    %c0_45 = arith.constant 0 : index
    %115 = vector.load %arg7[%c0_44, %c0_45] : memref<8x128xf32, #tpu.memory_space<vmem>>, vector<8x128xf32>
    tpu.vector_store %arg7[%c0_44, %c0_45], %112 {strides = array<i32>} : memref<8x128xf32, #tpu.memory_space<vmem>>, vector<8x128xf32>,
    %c0_46 = arith.constant 0 : index
    %c0_47 = arith.constant 0 : index
    %116 = vector.load %arg6[%c0_46, %c0_47] : memref<8x128xf32, #tpu.memory_space<vmem>>, vector<8x128xf32>
    tpu.vector_store %arg6[%c0_46, %c0_47], %114 {strides = array<i32>} : memref<8x128xf32, #tpu.memory_space<vmem>>, vector<8x128xf32>,
    %117 = arith.index_cast %c2_i32 : i32 to index
    %c0_48 = arith.constant 0 : index
    %c0_49 = arith.constant 0 : index
    %118 = vector.load %arg4[%117, %c0_48, %c0_49] : memref<8x8x128xf32, #tpu.memory_space<vmem>>, vector<1x8x128xf32>
    %119 = vector.shape_cast %118 : vector<1x8x128xf32> to vector<8x128xf32>
    %120 = vector.shape_cast %114 : vector<8x128xf32> to vector<1x8x128xf32>
    tpu.vector_store %arg4[%117, %c0_48, %c0_49], %120 {strides = array<i32>} : memref<8x8x128xf32, #tpu.memory_space<vmem>>, vector<1x8x128xf32>,
    %c3_i32 = arith.constant 3 : i32
    %c0_50 = arith.constant 0 : index
    %c0_51 = arith.constant 0 : index
    %121 = vector.load %arg6[%c0_50, %c0_51] : memref<8x128xf32, #tpu.memory_space<vmem>>, vector<8x128xf32>
    %c0_52 = arith.constant 0 : index
    %c0_53 = arith.constant 0 : index
    %122 = vector.load %arg7[%c0_52, %c0_53] : memref<8x128xf32, #tpu.memory_space<vmem>>, vector<8x128xf32>
    %123 = arith.index_cast %c3_i32 : i32 to index
    %c0_54 = arith.constant 0 : index
    %c0_55 = arith.constant 0 : index
    %124 = vector.load %arg2[%123, %c0_54, %c0_55] : memref<8x8x512xf32, #tpu.memory_space<vmem>>, vector<1x8x512xf32>
    %125 = vector.shape_cast %124 : vector<1x8x512xf32> to vector<8x512xf32>
    %126 = arith.truncf %121 : vector<8x128xf32> to vector<8x128xbf16>
    %cst_56 = arith.constant dense<0.000000e+00> : vector<8x512xf32>
    %127 = tpu.matmul %126, %3, %cst_56 {dimension_numbers = #tpu.dot_dimension_numbers<[1], [0], [0], [1], [0, 0, 1, 1], [], []>} : vector<8x128xbf16>, vector<128x512xbf16>, vector<8x512xf32> -> vector<8x512xf32>
    %128 = arith.addf %125, %127 : vector<8x512xf32>
    %129 = vector.extract_strided_slice %128 {offsets = [0, 0], sizes = [8, 128], strides = [1, 1]} : vector<8x512xf32> to vector<8x128xf32>
    %130 = arith.negf %129 : vector<8x128xf32>
    %131 = math.exp %130 : vector<8x128xf32>
    %cst_57 = arith.constant 1.000000e+00 : f32
    %132 = vector.broadcast %cst_57 : f32 to vector<8x128xf32>
    %133 = arith.addf %132, %131 : vector<8x128xf32>
    %134 = arith.divf %132, %133 : vector<8x128xf32>
    %135 = vector.extract_strided_slice %128 {offsets = [0, 128], sizes = [8, 128], strides = [1, 1]} : vector<8x512xf32> to vector<8x128xf32>
    %136 = arith.negf %135 : vector<8x128xf32>
    %137 = math.exp %136 : vector<8x128xf32>
    %cst_58 = arith.constant 1.000000e+00 : f32
    %138 = vector.broadcast %cst_58 : f32 to vector<8x128xf32>
    %139 = arith.addf %138, %137 : vector<8x128xf32>
    %140 = arith.divf %138, %139 : vector<8x128xf32>
    %141 = vector.extract_strided_slice %128 {offsets = [0, 256], sizes = [8, 128], strides = [1, 1]} : vector<8x512xf32> to vector<8x128xf32>
    %142 = math.tanh %141 : vector<8x128xf32>
    %143 = vector.extract_strided_slice %128 {offsets = [0, 384], sizes = [8, 128], strides = [1, 1]} : vector<8x512xf32> to vector<8x128xf32>
    %144 = arith.negf %143 : vector<8x128xf32>
    %145 = math.exp %144 : vector<8x128xf32>
    %cst_59 = arith.constant 1.000000e+00 : f32
    %146 = vector.broadcast %cst_59 : f32 to vector<8x128xf32>
    %147 = arith.addf %146, %145 : vector<8x128xf32>
    %148 = arith.divf %146, %147 : vector<8x128xf32>
    %149 = arith.mulf %140, %122 : vector<8x128xf32>
    %150 = arith.mulf %134, %142 : vector<8x128xf32>
    %151 = arith.addf %149, %150 : vector<8x128xf32>
    %152 = math.tanh %151 : vector<8x128xf32>
    %153 = arith.mulf %148, %152 : vector<8x128xf32>
    %c0_60 = arith.constant 0 : index
    %c0_61 = arith.constant 0 : index
    %154 = vector.load %arg7[%c0_60, %c0_61] : memref<8x128xf32, #tpu.memory_space<vmem>>, vector<8x128xf32>
    tpu.vector_store %arg7[%c0_60, %c0_61], %151 {strides = array<i32>} : memref<8x128xf32, #tpu.memory_space<vmem>>, vector<8x128xf32>,
    %c0_62 = arith.constant 0 : index
    %c0_63 = arith.constant 0 : index
    %155 = vector.load %arg6[%c0_62, %c0_63] : memref<8x128xf32, #tpu.memory_space<vmem>>, vector<8x128xf32>
    tpu.vector_store %arg6[%c0_62, %c0_63], %153 {strides = array<i32>} : memref<8x128xf32, #tpu.memory_space<vmem>>, vector<8x128xf32>,
    %156 = arith.index_cast %c3_i32 : i32 to index
    %c0_64 = arith.constant 0 : index
    %c0_65 = arith.constant 0 : index
    %157 = vector.load %arg4[%156, %c0_64, %c0_65] : memref<8x8x128xf32, #tpu.memory_space<vmem>>, vector<1x8x128xf32>
    %158 = vector.shape_cast %157 : vector<1x8x128xf32> to vector<8x128xf32>
    %159 = vector.shape_cast %153 : vector<8x128xf32> to vector<1x8x128xf32>
    tpu.vector_store %arg4[%156, %c0_64, %c0_65], %159 {strides = array<i32>} : memref<8x8x128xf32, #tpu.memory_space<vmem>>, vector<1x8x128xf32>,
    %c4_i32 = arith.constant 4 : i32
    %c0_66 = arith.constant 0 : index
    %c0_67 = arith.constant 0 : index
    %160 = vector.load %arg6[%c0_66, %c0_67] : memref<8x128xf32, #tpu.memory_space<vmem>>, vector<8x128xf32>
    %c0_68 = arith.constant 0 : index
    %c0_69 = arith.constant 0 : index
    %161 = vector.load %arg7[%c0_68, %c0_69] : memref<8x128xf32, #tpu.memory_space<vmem>>, vector<8x128xf32>
    %162 = arith.index_cast %c4_i32 : i32 to index
    %c0_70 = arith.constant 0 : index
    %c0_71 = arith.constant 0 : index
    %163 = vector.load %arg2[%162, %c0_70, %c0_71] : memref<8x8x512xf32, #tpu.memory_space<vmem>>, vector<1x8x512xf32>
    %164 = vector.shape_cast %163 : vector<1x8x512xf32> to vector<8x512xf32>
    %165 = arith.truncf %160 : vector<8x128xf32> to vector<8x128xbf16>
    %cst_72 = arith.constant dense<0.000000e+00> : vector<8x512xf32>
    %166 = tpu.matmul %165, %3, %cst_72 {dimension_numbers = #tpu.dot_dimension_numbers<[1], [0], [0], [1], [0, 0, 1, 1], [], []>} : vector<8x128xbf16>, vector<128x512xbf16>, vector<8x512xf32> -> vector<8x512xf32>
    %167 = arith.addf %164, %166 : vector<8x512xf32>
    %168 = vector.extract_strided_slice %167 {offsets = [0, 0], sizes = [8, 128], strides = [1, 1]} : vector<8x512xf32> to vector<8x128xf32>
    %169 = arith.negf %168 : vector<8x128xf32>
    %170 = math.exp %169 : vector<8x128xf32>
    %cst_73 = arith.constant 1.000000e+00 : f32
    %171 = vector.broadcast %cst_73 : f32 to vector<8x128xf32>
    %172 = arith.addf %171, %170 : vector<8x128xf32>
    %173 = arith.divf %171, %172 : vector<8x128xf32>
    %174 = vector.extract_strided_slice %167 {offsets = [0, 128], sizes = [8, 128], strides = [1, 1]} : vector<8x512xf32> to vector<8x128xf32>
    %175 = arith.negf %174 : vector<8x128xf32>
    %176 = math.exp %175 : vector<8x128xf32>
    %cst_74 = arith.constant 1.000000e+00 : f32
    %177 = vector.broadcast %cst_74 : f32 to vector<8x128xf32>
    %178 = arith.addf %177, %176 : vector<8x128xf32>
    %179 = arith.divf %177, %178 : vector<8x128xf32>
    %180 = vector.extract_strided_slice %167 {offsets = [0, 256], sizes = [8, 128], strides = [1, 1]} : vector<8x512xf32> to vector<8x128xf32>
    %181 = math.tanh %180 : vector<8x128xf32>
    %182 = vector.extract_strided_slice %167 {offsets = [0, 384], sizes = [8, 128], strides = [1, 1]} : vector<8x512xf32> to vector<8x128xf32>
    %183 = arith.negf %182 : vector<8x128xf32>
    %184 = math.exp %183 : vector<8x128xf32>
    %cst_75 = arith.constant 1.000000e+00 : f32
    %185 = vector.broadcast %cst_75 : f32 to vector<8x128xf32>
    %186 = arith.addf %185, %184 : vector<8x128xf32>
    %187 = arith.divf %185, %186 : vector<8x128xf32>
    %188 = arith.mulf %179, %161 : vector<8x128xf32>
    %189 = arith.mulf %173, %181 : vector<8x128xf32>
    %190 = arith.addf %188, %189 : vector<8x128xf32>
    %191 = math.tanh %190 : vector<8x128xf32>
    %192 = arith.mulf %187, %191 : vector<8x128xf32>
    %c0_76 = arith.constant 0 : index
    %c0_77 = arith.constant 0 : index
    %193 = vector.load %arg7[%c0_76, %c0_77] : memref<8x128xf32, #tpu.memory_space<vmem>>, vector<8x128xf32>
    tpu.vector_store %arg7[%c0_76, %c0_77], %190 {strides = array<i32>} : memref<8x128xf32, #tpu.memory_space<vmem>>, vector<8x128xf32>,
    %c0_78 = arith.constant 0 : index
    %c0_79 = arith.constant 0 : index
    %194 = vector.load %arg6[%c0_78, %c0_79] : memref<8x128xf32, #tpu.memory_space<vmem>>, vector<8x128xf32>
    tpu.vector_store %arg6[%c0_78, %c0_79], %192 {strides = array<i32>} : memref<8x128xf32, #tpu.memory_space<vmem>>, vector<8x128xf32>,
    %195 = arith.index_cast %c4_i32 : i32 to index
    %c0_80 = arith.constant 0 : index
    %c0_81 = arith.constant 0 : index
    %196 = vector.load %arg4[%195, %c0_80, %c0_81] : memref<8x8x128xf32, #tpu.memory_space<vmem>>, vector<1x8x128xf32>
    %197 = vector.shape_cast %196 : vector<1x8x128xf32> to vector<8x128xf32>
    %198 = vector.shape_cast %192 : vector<8x128xf32> to vector<1x8x128xf32>
    tpu.vector_store %arg4[%195, %c0_80, %c0_81], %198 {strides = array<i32>} : memref<8x8x128xf32, #tpu.memory_space<vmem>>, vector<1x8x128xf32>,
    %c5_i32 = arith.constant 5 : i32
    %c0_82 = arith.constant 0 : index
    %c0_83 = arith.constant 0 : index
    %199 = vector.load %arg6[%c0_82, %c0_83] : memref<8x128xf32, #tpu.memory_space<vmem>>, vector<8x128xf32>
    %c0_84 = arith.constant 0 : index
    %c0_85 = arith.constant 0 : index
    %200 = vector.load %arg7[%c0_84, %c0_85] : memref<8x128xf32, #tpu.memory_space<vmem>>, vector<8x128xf32>
    %201 = arith.index_cast %c5_i32 : i32 to index
    %c0_86 = arith.constant 0 : index
    %c0_87 = arith.constant 0 : index
    %202 = vector.load %arg2[%201, %c0_86, %c0_87] : memref<8x8x512xf32, #tpu.memory_space<vmem>>, vector<1x8x512xf32>
    %203 = vector.shape_cast %202 : vector<1x8x512xf32> to vector<8x512xf32>
    %204 = arith.truncf %199 : vector<8x128xf32> to vector<8x128xbf16>
    %cst_88 = arith.constant dense<0.000000e+00> : vector<8x512xf32>
    %205 = tpu.matmul %204, %3, %cst_88 {dimension_numbers = #tpu.dot_dimension_numbers<[1], [0], [0], [1], [0, 0, 1, 1], [], []>} : vector<8x128xbf16>, vector<128x512xbf16>, vector<8x512xf32> -> vector<8x512xf32>
    %206 = arith.addf %203, %205 : vector<8x512xf32>
    %207 = vector.extract_strided_slice %206 {offsets = [0, 0], sizes = [8, 128], strides = [1, 1]} : vector<8x512xf32> to vector<8x128xf32>
    %208 = arith.negf %207 : vector<8x128xf32>
    %209 = math.exp %208 : vector<8x128xf32>
    %cst_89 = arith.constant 1.000000e+00 : f32
    %210 = vector.broadcast %cst_89 : f32 to vector<8x128xf32>
    %211 = arith.addf %210, %209 : vector<8x128xf32>
    %212 = arith.divf %210, %211 : vector<8x128xf32>
    %213 = vector.extract_strided_slice %206 {offsets = [0, 128], sizes = [8, 128], strides = [1, 1]} : vector<8x512xf32> to vector<8x128xf32>
    %214 = arith.negf %213 : vector<8x128xf32>
    %215 = math.exp %214 : vector<8x128xf32>
    %cst_90 = arith.constant 1.000000e+00 : f32
    %216 = vector.broadcast %cst_90 : f32 to vector<8x128xf32>
    %217 = arith.addf %216, %215 : vector<8x128xf32>
    %218 = arith.divf %216, %217 : vector<8x128xf32>
    %219 = vector.extract_strided_slice %206 {offsets = [0, 256], sizes = [8, 128], strides = [1, 1]} : vector<8x512xf32> to vector<8x128xf32>
    %220 = math.tanh %219 : vector<8x128xf32>
    %221 = vector.extract_strided_slice %206 {offsets = [0, 384], sizes = [8, 128], strides = [1, 1]} : vector<8x512xf32> to vector<8x128xf32>
    %222 = arith.negf %221 : vector<8x128xf32>
    %223 = math.exp %222 : vector<8x128xf32>
    %cst_91 = arith.constant 1.000000e+00 : f32
    %224 = vector.broadcast %cst_91 : f32 to vector<8x128xf32>
    %225 = arith.addf %224, %223 : vector<8x128xf32>
    %226 = arith.divf %224, %225 : vector<8x128xf32>
    %227 = arith.mulf %218, %200 : vector<8x128xf32>
    %228 = arith.mulf %212, %220 : vector<8x128xf32>
    %229 = arith.addf %227, %228 : vector<8x128xf32>
    %230 = math.tanh %229 : vector<8x128xf32>
    %231 = arith.mulf %226, %230 : vector<8x128xf32>
    %c0_92 = arith.constant 0 : index
    %c0_93 = arith.constant 0 : index
    %232 = vector.load %arg7[%c0_92, %c0_93] : memref<8x128xf32, #tpu.memory_space<vmem>>, vector<8x128xf32>
    tpu.vector_store %arg7[%c0_92, %c0_93], %229 {strides = array<i32>} : memref<8x128xf32, #tpu.memory_space<vmem>>, vector<8x128xf32>,
    %c0_94 = arith.constant 0 : index
    %c0_95 = arith.constant 0 : index
    %233 = vector.load %arg6[%c0_94, %c0_95] : memref<8x128xf32, #tpu.memory_space<vmem>>, vector<8x128xf32>
    tpu.vector_store %arg6[%c0_94, %c0_95], %231 {strides = array<i32>} : memref<8x128xf32, #tpu.memory_space<vmem>>, vector<8x128xf32>,
    %234 = arith.index_cast %c5_i32 : i32 to index
    %c0_96 = arith.constant 0 : index
    %c0_97 = arith.constant 0 : index
    %235 = vector.load %arg4[%234, %c0_96, %c0_97] : memref<8x8x128xf32, #tpu.memory_space<vmem>>, vector<1x8x128xf32>
    %236 = vector.shape_cast %235 : vector<1x8x128xf32> to vector<8x128xf32>
    %237 = vector.shape_cast %231 : vector<8x128xf32> to vector<1x8x128xf32>
    tpu.vector_store %arg4[%234, %c0_96, %c0_97], %237 {strides = array<i32>} : memref<8x8x128xf32, #tpu.memory_space<vmem>>, vector<1x8x128xf32>,
    %c6_i32 = arith.constant 6 : i32
    %c0_98 = arith.constant 0 : index
    %c0_99 = arith.constant 0 : index
    %238 = vector.load %arg6[%c0_98, %c0_99] : memref<8x128xf32, #tpu.memory_space<vmem>>, vector<8x128xf32>
    %c0_100 = arith.constant 0 : index
    %c0_101 = arith.constant 0 : index
    %239 = vector.load %arg7[%c0_100, %c0_101] : memref<8x128xf32, #tpu.memory_space<vmem>>, vector<8x128xf32>
    %240 = arith.index_cast %c6_i32 : i32 to index
    %c0_102 = arith.constant 0 : index
    %c0_103 = arith.constant 0 : index
    %241 = vector.load %arg2[%240, %c0_102, %c0_103] : memref<8x8x512xf32, #tpu.memory_space<vmem>>, vector<1x8x512xf32>
    %242 = vector.shape_cast %241 : vector<1x8x512xf32> to vector<8x512xf32>
    %243 = arith.truncf %238 : vector<8x128xf32> to vector<8x128xbf16>
    %cst_104 = arith.constant dense<0.000000e+00> : vector<8x512xf32>
    %244 = tpu.matmul %243, %3, %cst_104 {dimension_numbers = #tpu.dot_dimension_numbers<[1], [0], [0], [1], [0, 0, 1, 1], [], []>} : vector<8x128xbf16>, vector<128x512xbf16>, vector<8x512xf32> -> vector<8x512xf32>
    %245 = arith.addf %242, %244 : vector<8x512xf32>
    %246 = vector.extract_strided_slice %245 {offsets = [0, 0], sizes = [8, 128], strides = [1, 1]} : vector<8x512xf32> to vector<8x128xf32>
    %247 = arith.negf %246 : vector<8x128xf32>
    %248 = math.exp %247 : vector<8x128xf32>
    %cst_105 = arith.constant 1.000000e+00 : f32
    %249 = vector.broadcast %cst_105 : f32 to vector<8x128xf32>
    %250 = arith.addf %249, %248 : vector<8x128xf32>
    %251 = arith.divf %249, %250 : vector<8x128xf32>
    %252 = vector.extract_strided_slice %245 {offsets = [0, 128], sizes = [8, 128], strides = [1, 1]} : vector<8x512xf32> to vector<8x128xf32>
    %253 = arith.negf %252 : vector<8x128xf32>
    %254 = math.exp %253 : vector<8x128xf32>
    %cst_106 = arith.constant 1.000000e+00 : f32
    %255 = vector.broadcast %cst_106 : f32 to vector<8x128xf32>
    %256 = arith.addf %255, %254 : vector<8x128xf32>
    %257 = arith.divf %255, %256 : vector<8x128xf32>
    %258 = vector.extract_strided_slice %245 {offsets = [0, 256], sizes = [8, 128], strides = [1, 1]} : vector<8x512xf32> to vector<8x128xf32>
    %259 = math.tanh %258 : vector<8x128xf32>
    %260 = vector.extract_strided_slice %245 {offsets = [0, 384], sizes = [8, 128], strides = [1, 1]} : vector<8x512xf32> to vector<8x128xf32>
    %261 = arith.negf %260 : vector<8x128xf32>
    %262 = math.exp %261 : vector<8x128xf32>
    %cst_107 = arith.constant 1.000000e+00 : f32
    %263 = vector.broadcast %cst_107 : f32 to vector<8x128xf32>
    %264 = arith.addf %263, %262 : vector<8x128xf32>
    %265 = arith.divf %263, %264 : vector<8x128xf32>
    %266 = arith.mulf %257, %239 : vector<8x128xf32>
    %267 = arith.mulf %251, %259 : vector<8x128xf32>
    %268 = arith.addf %266, %267 : vector<8x128xf32>
    %269 = math.tanh %268 : vector<8x128xf32>
    %270 = arith.mulf %265, %269 : vector<8x128xf32>
    %c0_108 = arith.constant 0 : index
    %c0_109 = arith.constant 0 : index
    %271 = vector.load %arg7[%c0_108, %c0_109] : memref<8x128xf32, #tpu.memory_space<vmem>>, vector<8x128xf32>
    tpu.vector_store %arg7[%c0_108, %c0_109], %268 {strides = array<i32>} : memref<8x128xf32, #tpu.memory_space<vmem>>, vector<8x128xf32>,
    %c0_110 = arith.constant 0 : index
    %c0_111 = arith.constant 0 : index
    %272 = vector.load %arg6[%c0_110, %c0_111] : memref<8x128xf32, #tpu.memory_space<vmem>>, vector<8x128xf32>
    tpu.vector_store %arg6[%c0_110, %c0_111], %270 {strides = array<i32>} : memref<8x128xf32, #tpu.memory_space<vmem>>, vector<8x128xf32>,
    %273 = arith.index_cast %c6_i32 : i32 to index
    %c0_112 = arith.constant 0 : index
    %c0_113 = arith.constant 0 : index
    %274 = vector.load %arg4[%273, %c0_112, %c0_113] : memref<8x8x128xf32, #tpu.memory_space<vmem>>, vector<1x8x128xf32>
    %275 = vector.shape_cast %274 : vector<1x8x128xf32> to vector<8x128xf32>
    %276 = vector.shape_cast %270 : vector<8x128xf32> to vector<1x8x128xf32>
    tpu.vector_store %arg4[%273, %c0_112, %c0_113], %276 {strides = array<i32>} : memref<8x8x128xf32, #tpu.memory_space<vmem>>, vector<1x8x128xf32>,
    %c7_i32 = arith.constant 7 : i32
    %c0_114 = arith.constant 0 : index
    %c0_115 = arith.constant 0 : index
    %277 = vector.load %arg6[%c0_114, %c0_115] : memref<8x128xf32, #tpu.memory_space<vmem>>, vector<8x128xf32>
    %c0_116 = arith.constant 0 : index
    %c0_117 = arith.constant 0 : index
    %278 = vector.load %arg7[%c0_116, %c0_117] : memref<8x128xf32, #tpu.memory_space<vmem>>, vector<8x128xf32>
    %279 = arith.index_cast %c7_i32 : i32 to index
    %c0_118 = arith.constant 0 : index
    %c0_119 = arith.constant 0 : index
    %280 = vector.load %arg2[%279, %c0_118, %c0_119] : memref<8x8x512xf32, #tpu.memory_space<vmem>>, vector<1x8x512xf32>
    %281 = vector.shape_cast %280 : vector<1x8x512xf32> to vector<8x512xf32>
    %282 = arith.truncf %277 : vector<8x128xf32> to vector<8x128xbf16>
    %cst_120 = arith.constant dense<0.000000e+00> : vector<8x512xf32>
    %283 = tpu.matmul %282, %3, %cst_120 {dimension_numbers = #tpu.dot_dimension_numbers<[1], [0], [0], [1], [0, 0, 1, 1], [], []>} : vector<8x128xbf16>, vector<128x512xbf16>, vector<8x512xf32> -> vector<8x512xf32>
    %284 = arith.addf %281, %283 : vector<8x512xf32>
    %285 = vector.extract_strided_slice %284 {offsets = [0, 0], sizes = [8, 128], strides = [1, 1]} : vector<8x512xf32> to vector<8x128xf32>
    %286 = arith.negf %285 : vector<8x128xf32>
    %287 = math.exp %286 : vector<8x128xf32>
    %cst_121 = arith.constant 1.000000e+00 : f32
    %288 = vector.broadcast %cst_121 : f32 to vector<8x128xf32>
    %289 = arith.addf %288, %287 : vector<8x128xf32>
    %290 = arith.divf %288, %289 : vector<8x128xf32>
    %291 = vector.extract_strided_slice %284 {offsets = [0, 128], sizes = [8, 128], strides = [1, 1]} : vector<8x512xf32> to vector<8x128xf32>
    %292 = arith.negf %291 : vector<8x128xf32>
    %293 = math.exp %292 : vector<8x128xf32>
    %cst_122 = arith.constant 1.000000e+00 : f32
    %294 = vector.broadcast %cst_122 : f32 to vector<8x128xf32>
    %295 = arith.addf %294, %293 : vector<8x128xf32>
    %296 = arith.divf %294, %295 : vector<8x128xf32>
    %297 = vector.extract_strided_slice %284 {offsets = [0, 256], sizes = [8, 128], strides = [1, 1]} : vector<8x512xf32> to vector<8x128xf32>
    %298 = math.tanh %297 : vector<8x128xf32>
    %299 = vector.extract_strided_slice %284 {offsets = [0, 384], sizes = [8, 128], strides = [1, 1]} : vector<8x512xf32> to vector<8x128xf32>
    %300 = arith.negf %299 : vector<8x128xf32>
    %301 = math.exp %300 : vector<8x128xf32>
    %cst_123 = arith.constant 1.000000e+00 : f32
    %302 = vector.broadcast %cst_123 : f32 to vector<8x128xf32>
    %303 = arith.addf %302, %301 : vector<8x128xf32>
    %304 = arith.divf %302, %303 : vector<8x128xf32>
    %305 = arith.mulf %296, %278 : vector<8x128xf32>
    %306 = arith.mulf %290, %298 : vector<8x128xf32>
    %307 = arith.addf %305, %306 : vector<8x128xf32>
    %308 = math.tanh %307 : vector<8x128xf32>
    %309 = arith.mulf %304, %308 : vector<8x128xf32>
    %c0_124 = arith.constant 0 : index
    %c0_125 = arith.constant 0 : index
    %310 = vector.load %arg7[%c0_124, %c0_125] : memref<8x128xf32, #tpu.memory_space<vmem>>, vector<8x128xf32>
    tpu.vector_store %arg7[%c0_124, %c0_125], %307 {strides = array<i32>} : memref<8x128xf32, #tpu.memory_space<vmem>>, vector<8x128xf32>,
    %c0_126 = arith.constant 0 : index
    %c0_127 = arith.constant 0 : index
    %311 = vector.load %arg6[%c0_126, %c0_127] : memref<8x128xf32, #tpu.memory_space<vmem>>, vector<8x128xf32>
    tpu.vector_store %arg6[%c0_126, %c0_127], %309 {strides = array<i32>} : memref<8x128xf32, #tpu.memory_space<vmem>>, vector<8x128xf32>,
    %312 = arith.index_cast %c7_i32 : i32 to index
    %c0_128 = arith.constant 0 : index
    %c0_129 = arith.constant 0 : index
    %313 = vector.load %arg4[%312, %c0_128, %c0_129] : memref<8x8x128xf32, #tpu.memory_space<vmem>>, vector<1x8x128xf32>
    %314 = vector.shape_cast %313 : vector<1x8x128xf32> to vector<8x128xf32>
    %315 = vector.shape_cast %309 : vector<8x128xf32> to vector<1x8x128xf32>
    tpu.vector_store %arg4[%312, %c0_128, %c0_129], %315 {strides = array<i32>} : memref<8x8x128xf32, #tpu.memory_space<vmem>>, vector<1x8x128xf32>,
    %c8_i32 = arith.constant 8 : i32
    %c0_i32_130 = arith.constant 0 : i32
    %316 = arith.cmpi eq, %arg1, %c0_i32_130 : i32
    %317 = arith.extui %316 : i1 to i32
    %c0_i32_131 = arith.constant 0 : i32
    %318 = arith.cmpi ne, %317, %c0_i32_131 : i32
    scf.if %318 {
      %c0_132 = arith.constant 0 : index
      %c0_133 = arith.constant 0 : index
      %319 = vector.load %arg7[%c0_132, %c0_133] : memref<8x128xf32, #tpu.memory_space<vmem>>, vector<8x128xf32>
      %c0_134 = arith.constant 0 : index
      %c0_135 = arith.constant 0 : index
      %c0_136 = arith.constant 0 : index
      %320 = vector.load %arg5[%c0_134, %c0_135, %c0_136] : memref<1x8x128xf32, #tpu.memory_space<vmem>>, vector<1x8x128xf32>
      %321 = vector.shape_cast %320 : vector<1x8x128xf32> to vector<8x128xf32>
      %322 = vector.shape_cast %319 : vector<8x128xf32> to vector<1x8x128xf32>
      tpu.vector_store %arg5[%c0_134, %c0_135, %c0_136], %322 {strides = array<i32>} : memref<1x8x128xf32, #tpu.memory_space<vmem>>, vector<1x8x128xf32>,
    } else {
    }
    return
  }
  func.func @transform_0(%arg0: i32, %arg1: i32) -> (i32, i32, i32) {
    %c0_i32 = arith.constant 0 : i32
    %c0_i32_0 = arith.constant 0 : i32
    return %arg1, %arg0, %c0_i32 : i32, i32, i32
  }
  func.func @transform_1(%arg0: i32, %arg1: i32) -> (i32, i32) {
    %c0_i32 = arith.constant 0 : i32
    %c0_i32_0 = arith.constant 0 : i32
    %c0_i32_1 = arith.constant 0 : i32
    return %c0_i32, %c0_i32_0 : i32, i32
  }
  func.func @transform_2(%arg0: i32, %arg1: i32) -> (i32, i32, i32) {
    %c0_i32 = arith.constant 0 : i32
    %c0_i32_0 = arith.constant 0 : i32
    return %arg1, %arg0, %c0_i32 : i32, i32, i32
  }
  func.func @transform_3(%arg0: i32, %arg1: i32) -> (i32, i32, i32) {
    %c0_i32 = arith.constant 0 : i32
    %c0_i32_0 = arith.constant 0 : i32
    %c0_i32_1 = arith.constant 0 : i32
    return %c0_i32, %arg0, %c0_i32_0 : i32, i32, i32
  }
}

</mosaic_0001>

<llo_original>
// kernel: tpu_custom_call.1
$region0: #{tpu_custom_call.1}
  #allocation0 [shape = 'u32[]', space=smem, size = 0x4, offset = 0x4, fixed_abs, tag = 'smem constant byte address 0x4 - core index']
  #allocation1 [shape = 'u32[144,128]{1,0:T(1,128)}', space=vmem, size = 0x12000, scoped, tag = 'internal scratch']
  #allocation2 [shape = 'f32[8,128]{1,0:T(8,128)}', space=vmem, size = 0x1000, scoped, tag = 'scratch operand']
  #allocation3 [shape = 'f32[8,128]{1,0:T(8,128)}', space=vmem, size = 0x1000, scoped, tag = 'scratch operand']
  %s0 = inlined_call_operand.hbm [shape: f32[8,8,512], index: 0, kind: input, shape index: {}]
  %s1 = inlined_call_operand.hbm [shape: bf16[128,512], index: 1, kind: input, shape index: {}]
  %s2 = inlined_call_operand.hbm [shape: f32[8,8,128], index: 2, kind: output, shape index: {0}]
  %s3 = inlined_call_operand.hbm [shape: f32[1,8,128], index: 3, kind: output, shape index: {1}]
  %4 = xla_tuple %s2, %s3
  %s5 = sld [smem:[#allocation0]]
  $region42: #{tpu_custom_call.1} parent=0
    _
  %s7 = ssub.s32 1, %s5
  %s8 = scalar_select 0, %s7, %s5
  $region1: #{tpu_custom_call.1} parent=0
    #allocation4 [shape = 'u8[131072]{0}', space=vmem, size = 0x20000, scoped, tag = 'input window, operand 0, single buffered']
    #allocation5 [shape = 's32[1]{0}', space=sflag, size = 0x4, scoped, tag = 'scoped memory for tpu_custom_call.1']
    #allocation6 [shape = 's32[1]{0}', space=sflag, size = 0x4, scoped, tag = 'scoped memory for tpu_custom_call.1']
    #allocation7 [shape = 'u8[131072]{0}', space=vmem, size = 0x20000, scoped, tag = 'input window, operand 1, single buffered']
    #allocation8 [shape = 's32[1]{0}', space=sflag, size = 0x4, scoped, tag = 'scoped memory for tpu_custom_call.1']
    #allocation9 [shape = 'u8[32768]{0}', space=vmem, size = 0x8000, scoped, tag = 'output window, operand 0, single buffered']
    #allocation10 [shape = 'u8[4096]{0}', space=vmem, size = 0x1000, scoped, tag = 'output window, operand 1, single buffered']
    #allocation11 [shape = 's32[1]{0}', space=sflag, size = 0x4, scoped, tag = 'scoped memory for tpu_custom_call.1']
    %9 = vsyncpa [#allocation5], 0
    %10 = vsyncpa [#allocation8], 0
    %11 = vsyncpa [#allocation6], 0
    %12 = vsyncpa [#allocation11], 0
    // Predicated region
    $region2: #{tpu_custom_call.1} parent=1 // pred_check
      _
    $region3: #{tpu_custom_call.1} parent=1 // pred_check_branch
      %14 = sbr.rel (0) target = $region5
    $region4: #{tpu_custom_call.1} parent=1 // pred_region
      %s16 = ssub.s32 4096, 4096
      %17 = vsyncadd [#allocation5], %s16
      %s18 = sshll.u32 [#allocation4], 4
      %s19 = int_to_ptr.vmem [resolvable:$true] %s18
      %24 = dma.hbm_to_vmem [thread:$0]  %s0, 4096, %s19, [#allocation5], 512, 512, 32
    $region5: #{tpu_custom_call.1} parent=1 // pred_fallthru
      _
    // Predicated region
    $region6: #{tpu_custom_call.1} parent=1 // pred_check
      _
    $region7: #{tpu_custom_call.1} parent=1 // pred_check_branch
      %26 = sbr.rel (0) target = $region9
    $region8: #{tpu_custom_call.1} parent=1 // pred_region
      %s28 = ssub.s32 4096, 4096
      %29 = vsyncadd [#allocation8], %s28
      %s30 = sshll.u32 [#allocation7], 4
      %s31 = int_to_ptr.vmem [resolvable:$true] %s30
      %36 = dma.hbm_to_vmem [thread:$0]  %s1, 4096, %s31, [#allocation8], 256, 256, 16
    $region9: #{tpu_custom_call.1} parent=1 // pred_fallthru
      _
    // Predicated region
    $region10: #{tpu_custom_call.1} parent=1 // pred_check
      _
    $region11: #{tpu_custom_call.1} parent=1 // pred_check_branch
      %38 = sbr.rel (0) target = $region13
    $region12: #{tpu_custom_call.1} parent=1 // pred_region
      %39 = dma.done [#allocation5], 4096
    $region13: #{tpu_custom_call.1} parent=1 // pred_fallthru
      _
    // Predicated region
    $region14: #{tpu_custom_call.1} parent=1 // pred_check
      _
    $region15: #{tpu_custom_call.1} parent=1 // pred_check_branch
      %41 = sbr.rel (0) target = $region17
    $region16: #{tpu_custom_call.1} parent=1 // pred_region
      %42 = dma.done [#allocation8], 4096
    $region17: #{tpu_custom_call.1} parent=1 // pred_fallthru
      _
    %p44 = scmp.eq.s32.totalorder 0, 0
    // Predicated region
    $region18: #{tpu_custom_call.1} parent=1 // pred_check
      %p45 = pneg %p44
    $region19: #{tpu_custom_call.1} parent=1 // pred_check_branch
      %47 = sbr.rel (%p45) target = $region21
    $region20: #{tpu_custom_call.1} parent=1 // pred_region
      %48 = vst [vmem:[#allocation2] sm:$0xff] 0.0
      %49 = vst [vmem:[#allocation3] sm:$0xff] 0.0
    $region21: #{tpu_custom_call.1} parent=1 // pred_fallthru
      _
    %v50 = vld [vmem:[#allocation7] sm:$0xff]
    %v51 = vld [vmem:[#allocation7 + $0x8] sm:$0xff]
    %v52 = vld [vmem:[#allocation7 + $0x10] sm:$0xff]
    %v53 = vld [vmem:[#allocation7 + $0x18] sm:$0xff]
    %v54 = vld [vmem:[#allocation7 + $0x20] sm:$0xff]
    %v55 = vld [vmem:[#allocation7 + $0x28] sm:$0xff]
    %v56 = vld [vmem:[#allocation7 + $0x30] sm:$0xff]
    %v57 = vld [vmem:[#allocation7 + $0x38] sm:$0xff]
    %v58 = vld [vmem:[#allocation7 + $0x40] sm:$0xff]
    %v59 = vld [vmem:[#allocation7 + $0x48] sm:$0xff]
    %v60 = vld [vmem:[#allocation7 + $0x50] sm:$0xff]
    %v61 = vld [vmem:[#allocation7 + $0x58] sm:$0xff]
    %v62 = vld [vmem:[#allocation7 + $0x60] sm:$0xff]
    %v63 = vld [vmem:[#allocation7 + $0x68] sm:$0xff]
    %v64 = vld [vmem:[#allocation7 + $0x70] sm:$0xff]
    %v65 = vld [vmem:[#allocation7 + $0x78] sm:$0xff]
    %v66 = vld [vmem:[#allocation7 + $0x80] sm:$0xff]
    %v67 = vld [vmem:[#allocation7 + $0x88] sm:$0xff]
    %v68 = vld [vmem:[#allocation7 + $0x90] sm:$0xff]
    %v69 = vld [vmem:[#allocation7 + $0x98] sm:$0xff]
    %v70 = vld [vmem:[#allocation7 + $0xa0] sm:$0xff]
    %v71 = vld [vmem:[#allocation7 + $0xa8] sm:$0xff]
    %v72 = vld [vmem:[#allocation7 + $0xb0] sm:$0xff]
    %v73 = vld [vmem:[#allocation7 + $0xb8] sm:$0xff]
    %v74 = vld [vmem:[#allocation7 + $0xc0] sm:$0xff]
    %v75 = vld [vmem:[#allocation7 + $0xc8] sm:$0xff]
    %v76 = vld [vmem:[#allocation7 + $0xd0] sm:$0xff]
    %v77 = vld [vmem:[#allocation7 + $0xd8] sm:$0xff]
    %v78 = vld [vmem:[#allocation7 + $0xe0] sm:$0xff]
    %v79 = vld [vmem:[#allocation7 + $0xe8] sm:$0xff]
    %v80 = vld [vmem:[#allocation7 + $0xf0] sm:$0xff]
    %v81 = vld [vmem:[#allocation7 + $0xf8] sm:$0xff]
    %v82 = vld [vmem:[#allocation2] sm:$0xff]
    %v83 = vld [vmem:[#allocation3] sm:$0xff]
    %v84 = vld [vmem:[#allocation4] sm:$0xff]
    %v85 = vld [vmem:[#allocation4 + $0x8] sm:$0xff]
    %v86 = vld [vmem:[#allocation4 + $0x10] sm:$0xff]
    %v87 = vld [vmem:[#allocation4 + $0x18] sm:$0xff]
    %v88 = vpack.c.bf16 %v82, %v82
    %v121 = vunpack.c.l.b16 %v50
    %v122 = vunpack.c.h.b16 %v50
    %v123 = vunpack.c.l.b16 %v51
    %v124 = vunpack.c.h.b16 %v51
    %v125 = vunpack.c.l.b16 %v52
    %v126 = vunpack.c.h.b16 %v52
    %v127 = vunpack.c.l.b16 %v53
    %v128 = vunpack.c.h.b16 %v53
    %v129 = vunpack.c.l.b16 %v54
    %v130 = vunpack.c.h.b16 %v54
    %v131 = vunpack.c.l.b16 %v55
    %v132 = vunpack.c.h.b16 %v55
    %v133 = vunpack.c.l.b16 %v56
    %v134 = vunpack.c.h.b16 %v56
    %v135 = vunpack.c.l.b16 %v57
    %v136 = vunpack.c.h.b16 %v57
    %v137 = vunpack.c.l.b16 %v58
    %v138 = vunpack.c.h.b16 %v58
    %v139 = vunpack.c.l.b16 %v59
    %v140 = vunpack.c.h.b16 %v59
    %v141 = vunpack.c.l.b16 %v60
    %v142 = vunpack.c.h.b16 %v60
    %v143 = vunpack.c.l.b16 %v61
    %v144 = vunpack.c.h.b16 %v61
    %v145 = vunpack.c.l.b16 %v62
    %v146 = vunpack.c.h.b16 %v62
    %v147 = vunpack.c.l.b16 %v63
    %v148 = vunpack.c.h.b16 %v63
    %v149 = vunpack.c.l.b16 %v64
    %v150 = vunpack.c.h.b16 %v64
    %v151 = vunpack.c.l.b16 %v65
    %v152 = vunpack.c.h.b16 %v65
    %v153 = vunpack.c.l.b16 %v66
    %v154 = vunpack.c.h.b16 %v66
    %v155 = vunpack.c.l.b16 %v67
    %v156 = vunpack.c.h.b16 %v67
    %v157 = vunpack.c.l.b16 %v68
    %v158 = vunpack.c.h.b16 %v68
    %v159 = vunpack.c.l.b16 %v69
    %v160 = vunpack.c.h.b16 %v69
    %v161 = vunpack.c.l.b16 %v70
    %v162 = vunpack.c.h.b16 %v70
    %v163 = vunpack.c.l.b16 %v71
    %v164 = vunpack.c.h.b16 %v71
    %v165 = vunpack.c.l.b16 %v72
    %v166 = vunpack.c.h.b16 %v72
    %v167 = vunpack.c.l.b16 %v73
    %v168 = vunpack.c.h.b16 %v73
    %v169 = vunpack.c.l.b16 %v74
    %v170 = vunpack.c.h.b16 %v74
    %v171 = vunpack.c.l.b16 %v75
    %v172 = vunpack.c.h.b16 %v75
    %v173 = vunpack.c.l.b16 %v76
    %v174 = vunpack.c.h.b16 %v76
    %v175 = vunpack.c.l.b16 %v77
    %v176 = vunpack.c.h.b16 %v77
    %v177 = vunpack.c.l.b16 %v78
    %v178 = vunpack.c.h.b16 %v78
    %v179 = vunpack.c.l.b16 %v79
    %v180 = vunpack.c.h.b16 %v79
    %v181 = vunpack.c.l.b16 %v80
    %v182 = vunpack.c.h.b16 %v80
    %v183 = vunpack.c.l.b16 %v81
    %v184 = vunpack.c.h.b16 %v81
    %v185 = vpack.c.b16 %v125, %v121
    %v186 = vpack.c.b16 %v126, %v122
    %v187 = vpack.c.b16 %v127, %v123
    %v188 = vpack.c.b16 %v128, %v124
    %v189 = vpack.c.b16 %v133, %v129
    %v190 = vpack.c.b16 %v134, %v130
    %v191 = vpack.c.b16 %v135, %v131
    %v192 = vpack.c.b16 %v136, %v132
    %v193 = vpack.c.b16 %v141, %v137
    %v194 = vpack.c.b16 %v142, %v138
    %v195 = vpack.c.b16 %v143, %v139
    %v196 = vpack.c.b16 %v144, %v140
    %v197 = vpack.c.b16 %v149, %v145
    %v198 = vpack.c.b16 %v150, %v146
    %v199 = vpack.c.b16 %v151, %v147
    %v200 = vpack.c.b16 %v152, %v148
    %v201 = vpack.c.b16 %v157, %v153
    %v202 = vpack.c.b16 %v158, %v154
    %v203 = vpack.c.b16 %v159, %v155
    %v204 = vpack.c.b16 %v160, %v156
    %v205 = vpack.c.b16 %v165, %v161
    %v206 = vpack.c.b16 %v166, %v162
    %v207 = vpack.c.b16 %v167, %v163
    %v208 = vpack.c.b16 %v168, %v164
    %v209 = vpack.c.b16 %v173, %v169
    %v210 = vpack.c.b16 %v174, %v170
    %v211 = vpack.c.b16 %v175, %v171
    %v212 = vpack.c.b16 %v176, %v172
    %v213 = vpack.c.b16 %v181, %v177
    %v214 = vpack.c.b16 %v182, %v178
    %v215 = vpack.c.b16 %v183, %v179
    %v216 = vpack.c.b16 %v184, %v180
    %249 = vmatprep.subr.bf16.mxu0 %v214
    %250 = vmatpush1.bf16.msra.mxu0 %v213
    %251 = vmatprep.subr.bf16.mxu0 %v210
    %252 = vmatpush1.bf16.msra.mxu0 %v209
    %253 = vmatprep.subr.bf16.mxu0 %v206
    %254 = vmatpush1.bf16.msra.mxu0 %v205
    %255 = vmatprep.subr.bf16.mxu0 %v202
    %256 = vmatpush1.bf16.msra.mxu0 %v201
    %257 = vmatprep.subr.bf16.mxu0 %v198
    %258 = vmatpush1.bf16.msra.mxu0 %v197
    %259 = vmatprep.subr.bf16.mxu0 %v194
    %260 = vmatpush1.bf16.msra.mxu0 %v193
    %261 = vmatprep.subr.bf16.mxu0 %v190
    %262 = vmatpush1.bf16.msra.mxu0 %v189
    %263 = vmatprep.subr.bf16.mxu0 %v186
    %264 = vmatpush1.bf16.msra.mxu0 %v185
    %265 = vmatprep.subr.bf16.mxu0 0
    %266 = vmatpush2.bf16.msra.mxu0 0
    %267 = vmatprep.subr.bf16.mxu0 0
    %268 = vmatpush2.bf16.msra.mxu0 0
    %269 = vmatprep.subr.bf16.mxu0 0
    %270 = vmatpush2.bf16.msra.mxu0 0
    %271 = vmatprep.subr.bf16.mxu0 0
    %272 = vmatpush2.bf16.msra.mxu0 0
    %273 = vmatprep.subr.bf16.mxu0 0
    %274 = vmatpush2.bf16.msra.mxu0 0
    %275 = vmatprep.subr.bf16.mxu0 0
    %276 = vmatpush2.bf16.msra.mxu0 0
    %277 = vmatprep.subr.bf16.mxu0 0
    %278 = vmatpush2.bf16.msra.mxu0 0
    %279 = vmatprep.subr.bf16.mxu0 0
    %280 = vmatpush2.bf16.msra.mxu0 0
    %281 = vmatprep.mubr.bf16.mxu0 0
    %282 = vmatmul.mubr.bf16.gmra.mxu0 %v88
    %v283 = vpop.f32.mrf.mxu0
    %v284 = vadd.f32 0.0, %v283
    %v285 = vpop.f32.mrf.mxu0
    %v286 = vadd.f32 0.0, %v285
    %v287 = vpop.f32.mrf.mxu0
    %v288 = vpop.f32.mrf.mxu0
    %289 = vdwg.mxu0
    %290 = vmatprep.subr.bf16.mxu0 %v216
    %291 = vmatpush1.bf16.msra.mxu0 %v215
    %292 = vmatprep.subr.bf16.mxu0 %v212
    %293 = vmatpush1.bf16.msra.mxu0 %v211
    %294 = vmatprep.subr.bf16.mxu0 %v208
    %295 = vmatpush1.bf16.msra.mxu0 %v207
    %296 = vmatprep.subr.bf16.mxu0 %v204
    %297 = vmatpush1.bf16.msra.mxu0 %v203
    %298 = vmatprep.subr.bf16.mxu0 %v200
    %299 = vmatpush1.bf16.msra.mxu0 %v199
    %300 = vmatprep.subr.bf16.mxu0 %v196
    %301 = vmatpush1.bf16.msra.mxu0 %v195
    %302 = vmatprep.subr.bf16.mxu0 %v192
    %303 = vmatpush1.bf16.msra.mxu0 %v191
    %304 = vmatprep.subr.bf16.mxu0 %v188
    %305 = vmatpush1.bf16.msra.mxu0 %v187
    %306 = vmatprep.subr.bf16.mxu0 0
    %307 = vmatpush2.bf16.msra.mxu0 0
    %308 = vmatprep.subr.bf16.mxu0 0
    %309 = vmatpush2.bf16.msra.mxu0 0
    %310 = vmatprep.subr.bf16.mxu0 0
    %311 = vmatpush2.bf16.msra.mxu0 0
    %312 = vmatprep.subr.bf16.mxu0 0
    %313 = vmatpush2.bf16.msra.mxu0 0
    %314 = vmatprep.subr.bf16.mxu0 0
    %315 = vmatpush2.bf16.msra.mxu0 0
    %316 = vmatprep.subr.bf16.mxu0 0
    %317 = vmatpush2.bf16.msra.mxu0 0
    %318 = vmatprep.subr.bf16.mxu0 0
    %319 = vmatpush2.bf16.msra.mxu0 0
    %320 = vmatprep.subr.bf16.mxu0 0
    %321 = vmatpush2.bf16.msra.mxu0 0
    %322 = vmatprep.mubr.bf16.mxu0 0
    %323 = vmatmul.mubr.bf16.gmra.mxu0 %v88
    %v324 = vpop.f32.mrf.mxu0
    %v325 = vadd.f32 0.0, %v324
    %v326 = vpop.f32.mrf.mxu0
    %v327 = vadd.f32 0.0, %v326
    %v328 = vpop.f32.mrf.mxu0
    %v329 = vpop.f32.mrf.mxu0
    %330 = vdwg.mxu0
    %v331 = vadd.f32 %v84, %v284
    %v332 = vadd.f32 %v85, %v286
    %v333 = vadd.f32 %v86, %v325
    %v334 = vadd.f32 %v87, %v327
    %v335 = vxor.u32 %v331, 2147483648
    %v336 = vmul.f32 %v335, 1.442695
    %v337 = vpow.pop %v336
    %v338 = vadd.f32 %v337, 1.0
    %v339 = vrcp.pop %v338
    %v340 = vmul.f32 1.0, %v339
    %v341 = vxor.u32 %v332, 2147483648
    %v342 = vmul.f32 %v341, 1.442695
    %v343 = vpow.pop %v342
    %v344 = vadd.f32 %v343, 1.0
    %v345 = vrcp.pop %v344
    %v346 = vmul.f32 1.0, %v345
    %v347 = vtanh.pop %v333
    %v348 = vxor.u32 %v334, 2147483648
    %v349 = vmul.f32 %v348, 1.442695
    %v350 = vpow.pop %v349
    %v351 = vadd.f32 %v350, 1.0
    %v352 = vrcp.pop %v351
    %v353 = vmul.f32 1.0, %v352
    %v354 = vmul.f32 %v346, %v83
    %v355 = vmul.f32 %v340, %v347
    %v356 = vadd.f32 %v354, %v355
    %v357 = vtanh.pop %v356
    %v358 = vmul.f32 %v353, %v357
    %359 = vst [vmem:[#allocation3] sm:$0xff] %v356
    %360 = vst [vmem:[#allocation2] sm:$0xff] %v358
    %361 = vst [vmem:[#allocation9] sm:$0xff] %v358
    %v362 = vld [vmem:[#allocation2] sm:$0xff]
    %v363 = vld [vmem:[#allocation3] sm:$0xff]
    %s364 = scalar_lea.vmem [#allocation4], 32
    %v365 = vld [vmem:[%s364] sm:$0xff]
    %v366 = vld [vmem:[%s364 + $0x8] sm:$0xff]
    %v367 = vld [vmem:[%s364 + $0x10] sm:$0xff]
    %v368 = vld [vmem:[%s364 + $0x18] sm:$0xff]
    %v369 = vpack.c.bf16 %v362, %v362
    %370 = vmatprep.subr.bf16.mxu0 %v214
    %371 = vmatpush1.bf16.msra.mxu0 %v213
    %372 = vmatprep.subr.bf16.mxu0 %v210
    %373 = vmatpush1.bf16.msra.mxu0 %v209
    %374 = vmatprep.subr.bf16.mxu0 %v206
    %375 = vmatpush1.bf16.msra.mxu0 %v205
    %376 = vmatprep.subr.bf16.mxu0 %v202
    %377 = vmatpush1.bf16.msra.mxu0 %v201
    %378 = vmatprep.subr.bf16.mxu0 %v198
    %379 = vmatpush1.bf16.msra.mxu0 %v197
    %380 = vmatprep.subr.bf16.mxu0 %v194
    %381 = vmatpush1.bf16.msra.mxu0 %v193
    %382 = vmatprep.subr.bf16.mxu0 %v190
    %383 = vmatpush1.bf16.msra.mxu0 %v189
    %384 = vmatprep.subr.bf16.mxu0 %v186
    %385 = vmatpush1.bf16.msra.mxu0 %v185
    %386 = vmatprep.subr.bf16.mxu0 0
    %387 = vmatpush2.bf16.msra.mxu0 0
    %388 = vmatprep.subr.bf16.mxu0 0
    %389 = vmatpush2.bf16.msra.mxu0 0
    %390 = vmatprep.subr.bf16.mxu0 0
    %391 = vmatpush2.bf16.msra.mxu0 0
    %392 = vmatprep.subr.bf16.mxu0 0
    %393 = vmatpush2.bf16.msra.mxu0 0
    %394 = vmatprep.subr.bf16.mxu0 0
    %395 = vmatpush2.bf16.msra.mxu0 0
    %396 = vmatprep.subr.bf16.mxu0 0
    %397 = vmatpush2.bf16.msra.mxu0 0
    %398 = vmatprep.subr.bf16.mxu0 0
    %399 = vmatpush2.bf16.msra.mxu0 0
    %400 = vmatprep.subr.bf16.mxu0 0
    %401 = vmatpush2.bf16.msra.mxu0 0
    %402 = vmatprep.mubr.bf16.mxu0 0
    %403 = vmatmul.mubr.bf16.gmra.mxu0 %v369
    %v404 = vpop.f32.mrf.mxu0
    %v405 = vadd.f32 0.0, %v404
    %v406 = vpop.f32.mrf.mxu0
    %v407 = vadd.f32 0.0, %v406
    %v408 = vpop.f32.mrf.mxu0
    %v409 = vpop.f32.mrf.mxu0
    %410 = vdwg.mxu0
    %411 = vmatprep.subr.bf16.mxu0 %v216
    %412 = vmatpush1.bf16.msra.mxu0 %v215
    %413 = vmatprep.subr.bf16.mxu0 %v212
    %414 = vmatpush1.bf16.msra.mxu0 %v211
    %415 = vmatprep.subr.bf16.mxu0 %v208
    %416 = vmatpush1.bf16.msra.mxu0 %v207
    %417 = vmatprep.subr.bf16.mxu0 %v204
    %418 = vmatpush1.bf16.msra.mxu0 %v203
    %419 = vmatprep.subr.bf16.mxu0 %v200
    %420 = vmatpush1.bf16.msra.mxu0 %v199
    %421 = vmatprep.subr.bf16.mxu0 %v196
    %422 = vmatpush1.bf16.msra.mxu0 %v195
    %423 = vmatprep.subr.bf16.mxu0 %v192
    %424 = vmatpush1.bf16.msra.mxu0 %v191
    %425 = vmatprep.subr.bf16.mxu0 %v188
    %426 = vmatpush1.bf16.msra.mxu0 %v187
    %427 = vmatprep.subr.bf16.mxu0 0
    %428 = vmatpush2.bf16.msra.mxu0 0
    %429 = vmatprep.subr.bf16.mxu0 0
    %430 = vmatpush2.bf16.msra.mxu0 0
    %431 = vmatprep.subr.bf16.mxu0 0
    %432 = vmatpush2.bf16.msra.mxu0 0
    %433 = vmatprep.subr.bf16.mxu0 0
    %434 = vmatpush2.bf16.msra.mxu0 0
    %435 = vmatprep.subr.bf16.mxu0 0
    %436 = vmatpush2.bf16.msra.mxu0 0
    %437 = vmatprep.subr.bf16.mxu0 0
    %438 = vmatpush2.bf16.msra.mxu0 0
    %439 = vmatprep.subr.bf16.mxu0 0
    %440 = vmatpush2.bf16.msra.mxu0 0
    %441 = vmatprep.subr.bf16.mxu0 0
    %442 = vmatpush2.bf16.msra.mxu0 0
    %443 = vmatprep.mubr.bf16.mxu0 0
    %444 = vmatmul.mubr.bf16.gmra.mxu0 %v369
    %v445 = vpop.f32.mrf.mxu0
    %v446 = vadd.f32 0.0, %v445
    %v447 = vpop.f32.mrf.mxu0
    %v448 = vadd.f32 0.0, %v447
    %v449 = vpop.f32.mrf.mxu0
    %v450 = vpop.f32.mrf.mxu0
    %451 = vdwg.mxu0
    %v452 = vadd.f32 %v365, %v405
    %v453 = vadd.f32 %v366, %v407
    %v454 = vadd.f32 %v367, %v446
    %v455 = vadd.f32 %v368, %v448
    %v456 = vxor.u32 %v452, 2147483648
    %v457 = vmul.f32 %v456, 1.442695
    %v458 = vpow.pop %v457
    %v459 = vadd.f32 %v458, 1.0
    %v460 = vrcp.pop %v459
    %v461 = vmul.f32 1.0, %v460
    %v462 = vxor.u32 %v453, 2147483648
    %v463 = vmul.f32 %v462, 1.442695
    %v464 = vpow.pop %v463
    %v465 = vadd.f32 %v464, 1.0
    %v466 = vrcp.pop %v465
    %v467 = vmul.f32 1.0, %v466
    %v468 = vtanh.pop %v454
    %v469 = vxor.u32 %v455, 2147483648
    %v470 = vmul.f32 %v469, 1.442695
    %v471 = vpow.pop %v470
    %v472 = vadd.f32 %v471, 1.0
    %v473 = vrcp.pop %v472
    %v474 = vmul.f32 1.0, %v473
    %v475 = vmul.f32 %v467, %v363
    %v476 = vmul.f32 %v461, %v468
    %v477 = vadd.f32 %v475, %v476
    %v478 = vtanh.pop %v477
    %v479 = vmul.f32 %v474, %v478
    %480 = vst [vmem:[#allocation3] sm:$0xff] %v477
    %481 = vst [vmem:[#allocation2] sm:$0xff] %v479
    %s482 = scalar_lea.vmem [#allocation9], 8
    %483 = vst [vmem:[%s482] sm:$0xff] %v479
    %v484 = vld [vmem:[#allocation2] sm:$0xff]
    %v485 = vld [vmem:[#allocation3] sm:$0xff]
    %s486 = scalar_lea.vmem [#allocation4], 64
    %v487 = vld [vmem:[%s486] sm:$0xff]
    %v488 = vld [vmem:[%s486 + $0x8] sm:$0xff]
    %v489 = vld [vmem:[%s486 + $0x10] sm:$0xff]
    %v490 = vld [vmem:[%s486 + $0x18] sm:$0xff]
    %v491 = vpack.c.bf16 %v484, %v484
    %492 = vmatprep.subr.bf16.mxu0 %v214
    %493 = vmatpush1.bf16.msra.mxu0 %v213
    %494 = vmatprep.subr.bf16.mxu0 %v210
    %495 = vmatpush1.bf16.msra.mxu0 %v209
    %496 = vmatprep.subr.bf16.mxu0 %v206
    %497 = vmatpush1.bf16.msra.mxu0 %v205
    %498 = vmatprep.subr.bf16.mxu0 %v202
    %499 = vmatpush1.bf16.msra.mxu0 %v201
    %500 = vmatprep.subr.bf16.mxu0 %v198
    %501 = vmatpush1.bf16.msra.mxu0 %v197
    %502 = vmatprep.subr.bf16.mxu0 %v194
    %503 = vmatpush1.bf16.msra.mxu0 %v193
    %504 = vmatprep.subr.bf16.mxu0 %v190
    %505 = vmatpush1.bf16.msra.mxu0 %v189
    %506 = vmatprep.subr.bf16.mxu0 %v186
    %507 = vmatpush1.bf16.msra.mxu0 %v185
    %508 = vmatprep.subr.bf16.mxu0 0
    %509 = vmatpush2.bf16.msra.mxu0 0
    %510 = vmatprep.subr.bf16.mxu0 0
    %511 = vmatpush2.bf16.msra.mxu0 0
    %512 = vmatprep.subr.bf16.mxu0 0
    %513 = vmatpush2.bf16.msra.mxu0 0
    %514 = vmatprep.subr.bf16.mxu0 0
    %515 = vmatpush2.bf16.msra.mxu0 0
    %516 = vmatprep.subr.bf16.mxu0 0
    %517 = vmatpush2.bf16.msra.mxu0 0
    %518 = vmatprep.subr.bf16.mxu0 0
    %519 = vmatpush2.bf16.msra.mxu0 0
    %520 = vmatprep.subr.bf16.mxu0 0
    %521 = vmatpush2.bf16.msra.mxu0 0
    %522 = vmatprep.subr.bf16.mxu0 0
    %523 = vmatpush2.bf16.msra.mxu0 0
    %524 = vmatprep.mubr.bf16.mxu0 0
    %525 = vmatmul.mubr.bf16.gmra.mxu0 %v491
    %v526 = vpop.f32.mrf.mxu0
    %v527 = vadd.f32 0.0, %v526
    %v528 = vpop.f32.mrf.mxu0
    %v529 = vadd.f32 0.0, %v528
    %v530 = vpop.f32.mrf.mxu0
    %v531 = vpop.f32.mrf.mxu0
    %532 = vdwg.mxu0
    %533 = vmatprep.subr.bf16.mxu0 %v216
    %534 = vmatpush1.bf16.msra.mxu0 %v215
    %535 = vmatprep.subr.bf16.mxu0 %v212
    %536 = vmatpush1.bf16.msra.mxu0 %v211
    %537 = vmatprep.subr.bf16.mxu0 %v208
    %538 = vmatpush1.bf16.msra.mxu0 %v207
    %539 = vmatprep.subr.bf16.mxu0 %v204
    %540 = vmatpush1.bf16.msra.mxu0 %v203
    %541 = vmatprep.subr.bf16.mxu0 %v200
    %542 = vmatpush1.bf16.msra.mxu0 %v199
    %543 = vmatprep.subr.bf16.mxu0 %v196
    %544 = vmatpush1.bf16.msra.mxu0 %v195
    %545 = vmatprep.subr.bf16.mxu0 %v192
    %546 = vmatpush1.bf16.msra.mxu0 %v191
    %547 = vmatprep.subr.bf16.mxu0 %v188
    %548 = vmatpush1.bf16.msra.mxu0 %v187
    %549 = vmatprep.subr.bf16.mxu0 0
    %550 = vmatpush2.bf16.msra.mxu0 0
    %551 = vmatprep.subr.bf16.mxu0 0
    %552 = vmatpush2.bf16.msra.mxu0 0
    %553 = vmatprep.subr.bf16.mxu0 0
    %554 = vmatpush2.bf16.msra.mxu0 0
    %555 = vmatprep.subr.bf16.mxu0 0
    %556 = vmatpush2.bf16.msra.mxu0 0
    %557 = vmatprep.subr.bf16.mxu0 0
    %558 = vmatpush2.bf16.msra.mxu0 0
    %559 = vmatprep.subr.bf16.mxu0 0
    %560 = vmatpush2.bf16.msra.mxu0 0
    %561 = vmatprep.subr.bf16.mxu0 0
    %562 = vmatpush2.bf16.msra.mxu0 0
    %563 = vmatprep.subr.bf16.mxu0 0
    %564 = vmatpush2.bf16.msra.mxu0 0
    %565 = vmatprep.mubr.bf16.mxu0 0
    %566 = vmatmul.mubr.bf16.gmra.mxu0 %v491
    %v567 = vpop.f32.mrf.mxu0
    %v568 = vadd.f32 0.0, %v567
    %v569 = vpop.f32.mrf.mxu0
    %v570 = vadd.f32 0.0, %v569
    %v571 = vpop.f32.mrf.mxu0
    %v572 = vpop.f32.mrf.mxu0
    %573 = vdwg.mxu0
    %v574 = vadd.f32 %v487, %v527
    %v575 = vadd.f32 %v488, %v529
    %v576 = vadd.f32 %v489, %v568
    %v577 = vadd.f32 %v490, %v570
    %v578 = vxor.u32 %v574, 2147483648
    %v579 = vmul.f32 %v578, 1.442695
    %v580 = vpow.pop %v579
    %v581 = vadd.f32 %v580, 1.0
    %v582 = vrcp.pop %v581
    %v583 = vmul.f32 1.0, %v582
    %v584 = vxor.u32 %v575, 2147483648
    %v585 = vmul.f32 %v584, 1.442695
    %v586 = vpow.pop %v585
    %v587 = vadd.f32 %v586, 1.0
    %v588 = vrcp.pop %v587
    %v589 = vmul.f32 1.0, %v588
    %v590 = vtanh.pop %v576
    %v591 = vxor.u32 %v577, 2147483648
    %v592 = vmul.f32 %v591, 1.442695
    %v593 = vpow.pop %v592
    %v594 = vadd.f32 %v593, 1.0
    %v595 = vrcp.pop %v594
    %v596 = vmul.f32 1.0, %v595
    %v597 = vmul.f32 %v589, %v485
    %v598 = vmul.f32 %v583, %v590
    %v599 = vadd.f32 %v597, %v598
    %v600 = vtanh.pop %v599
    %v601 = vmul.f32 %v596, %v600
    %602 = vst [vmem:[#allocation3] sm:$0xff] %v599
    %603 = vst [vmem:[#allocation2] sm:$0xff] %v601
    %s604 = scalar_lea.vmem [#allocation9], 16
    %605 = vst [vmem:[%s604] sm:$0xff] %v601
    %v606 = vld [vmem:[#allocation2] sm:$0xff]
    %v607 = vld [vmem:[#allocation3] sm:$0xff]
    %s608 = scalar_lea.vmem [#allocation4], 96
    %v609 = vld [vmem:[%s608] sm:$0xff]
    %v610 = vld [vmem:[%s608 + $0x8] sm:$0xff]
    %v611 = vld [vmem:[%s608 + $0x10] sm:$0xff]
    %v612 = vld [vmem:[%s608 + $0x18] sm:$0xff]
    %v613 = vpack.c.bf16 %v606, %v606
    %614 = vmatprep.subr.bf16.mxu0 %v214
    %615 = vmatpush1.bf16.msra.mxu0 %v213
    %616 = vmatprep.subr.bf16.mxu0 %v210
    %617 = vmatpush1.bf16.msra.mxu0 %v209
    %618 = vmatprep.subr.bf16.mxu0 %v206
    %619 = vmatpush1.bf16.msra.mxu0 %v205
    %620 = vmatprep.subr.bf16.mxu0 %v202
    %621 = vmatpush1.bf16.msra.mxu0 %v201
    %622 = vmatprep.subr.bf16.mxu0 %v198
    %623 = vmatpush1.bf16.msra.mxu0 %v197
    %624 = vmatprep.subr.bf16.mxu0 %v194
    %625 = vmatpush1.bf16.msra.mxu0 %v193
    %626 = vmatprep.subr.bf16.mxu0 %v190
    %627 = vmatpush1.bf16.msra.mxu0 %v189
    %628 = vmatprep.subr.bf16.mxu0 %v186
    %629 = vmatpush1.bf16.msra.mxu0 %v185
    %630 = vmatprep.subr.bf16.mxu0 0
    %631 = vmatpush2.bf16.msra.mxu0 0
    %632 = vmatprep.subr.bf16.mxu0 0
    %633 = vmatpush2.bf16.msra.mxu0 0
    %634 = vmatprep.subr.bf16.mxu0 0
    %635 = vmatpush2.bf16.msra.mxu0 0
    %636 = vmatprep.subr.bf16.mxu0 0
    %637 = vmatpush2.bf16.msra.mxu0 0
    %638 = vmatprep.subr.bf16.mxu0 0
    %639 = vmatpush2.bf16.msra.mxu0 0
    %640 = vmatprep.subr.bf16.mxu0 0
    %641 = vmatpush2.bf16.msra.mxu0 0
    %642 = vmatprep.subr.bf16.mxu0 0
    %643 = vmatpush2.bf16.msra.mxu0 0
    %644 = vmatprep.subr.bf16.mxu0 0
    %645 = vmatpush2.bf16.msra.mxu0 0
    %646 = vmatprep.mubr.bf16.mxu0 0
    %647 = vmatmul.mubr.bf16.gmra.mxu0 %v613
    %v648 = vpop.f32.mrf.mxu0
    %v649 = vadd.f32 0.0, %v648
    %v650 = vpop.f32.mrf.mxu0
    %v651 = vadd.f32 0.0, %v650
    %v652 = vpop.f32.mrf.mxu0
    %v653 = vpop.f32.mrf.mxu0
    %654 = vdwg.mxu0
    %655 = vmatprep.subr.bf16.mxu0 %v216
    %656 = vmatpush1.bf16.msra.mxu0 %v215
    %657 = vmatprep.subr.bf16.mxu0 %v212
    %658 = vmatpush1.bf16.msra.mxu0 %v211
    %659 = vmatprep.subr.bf16.mxu0 %v208
    %660 = vmatpush1.bf16.msra.mxu0 %v207
    %661 = vmatprep.subr.bf16.mxu0 %v204
    %662 = vmatpush1.bf16.msra.mxu0 %v203
    %663 = vmatprep.subr.bf16.mxu0 %v200
    %664 = vmatpush1.bf16.msra.mxu0 %v199
    %665 = vmatprep.subr.bf16.mxu0 %v196
    %666 = vmatpush1.bf16.msra.mxu0 %v195
    %667 = vmatprep.subr.bf16.mxu0 %v192
    %668 = vmatpush1.bf16.msra.mxu0 %v191
    %669 = vmatprep.subr.bf16.mxu0 %v188
    %670 = vmatpush1.bf16.msra.mxu0 %v187
    %671 = vmatprep.subr.bf16.mxu0 0
    %672 = vmatpush2.bf16.msra.mxu0 0
    %673 = vmatprep.subr.bf16.mxu0 0
    %674 = vmatpush2.bf16.msra.mxu0 0
    %675 = vmatprep.subr.bf16.mxu0 0
    %676 = vmatpush2.bf16.msra.mxu0 0
    %677 = vmatprep.subr.bf16.mxu0 0
    %678 = vmatpush2.bf16.msra.mxu0 0
    %679 = vmatprep.subr.bf16.mxu0 0
    %680 = vmatpush2.bf16.msra.mxu0 0
    %681 = vmatprep.subr.bf16.mxu0 0
    %682 = vmatpush2.bf16.msra.mxu0 0
    %683 = vmatprep.subr.bf16.mxu0 0
    %684 = vmatpush2.bf16.msra.mxu0 0
    %685 = vmatprep.subr.bf16.mxu0 0
    %686 = vmatpush2.bf16.msra.mxu0 0
    %687 = vmatprep.mubr.bf16.mxu0 0
    %688 = vmatmul.mubr.bf16.gmra.mxu0 %v613
    %v689 = vpop.f32.mrf.mxu0
    %v690 = vadd.f32 0.0, %v689
    %v691 = vpop.f32.mrf.mxu0
    %v692 = vadd.f32 0.0, %v691
    %v693 = vpop.f32.mrf.mxu0
    %v694 = vpop.f32.mrf.mxu0
    %695 = vdwg.mxu0
    %v696 = vadd.f32 %v609, %v649
    %v697 = vadd.f32 %v610, %v651
    %v698 = vadd.f32 %v611, %v690
    %v699 = vadd.f32 %v612, %v692
    %v700 = vxor.u32 %v696, 2147483648
    %v701 = vmul.f32 %v700, 1.442695
    %v702 = vpow.pop %v701
    %v703 = vadd.f32 %v702, 1.0
    %v704 = vrcp.pop %v703
    %v705 = vmul.f32 1.0, %v704
    %v706 = vxor.u32 %v697, 2147483648
    %v707 = vmul.f32 %v706, 1.442695
    %v708 = vpow.pop %v707
    %v709 = vadd.f32 %v708, 1.0
    %v710 = vrcp.pop %v709
    %v711 = vmul.f32 1.0, %v710
    %v712 = vtanh.pop %v698
    %v713 = vxor.u32 %v699, 2147483648
    %v714 = vmul.f32 %v713, 1.442695
    %v715 = vpow.pop %v714
    %v716 = vadd.f32 %v715, 1.0
    %v717 = vrcp.pop %v716
    %v718 = vmul.f32 1.0, %v717
    %v719 = vmul.f32 %v711, %v607
    %v720 = vmul.f32 %v705, %v712
    %v721 = vadd.f32 %v719, %v720
    %v722 = vtanh.pop %v721
    %v723 = vmul.f32 %v718, %v722
    %724 = vst [vmem:[#allocation3] sm:$0xff] %v721
    %725 = vst [vmem:[#allocation2] sm:$0xff] %v723
    %s726 = scalar_lea.vmem [#allocation9], 24
    %727 = vst [vmem:[%s726] sm:$0xff] %v723
    %v728 = vld [vmem:[#allocation2] sm:$0xff]
    %v729 = vld [vmem:[#allocation3] sm:$0xff]
    %s730 = scalar_lea.vmem [#allocation4], 128
    %v731 = vld [vmem:[%s730] sm:$0xff]
    %v732 = vld [vmem:[%s730 + $0x8] sm:$0xff]
    %v733 = vld [vmem:[%s730 + $0x10] sm:$0xff]
    %v734 = vld [vmem:[%s730 + $0x18] sm:$0xff]
    %v735 = vpack.c.bf16 %v728, %v728
    %736 = vmatprep.subr.bf16.mxu0 %v214
    %737 = vmatpush1.bf16.msra.mxu0 %v213
    %738 = vmatprep.subr.bf16.mxu0 %v210
    %739 = vmatpush1.bf16.msra.mxu0 %v209
    %740 = vmatprep.subr.bf16.mxu0 %v206
    %741 = vmatpush1.bf16.msra.mxu0 %v205
    %742 = vmatprep.subr.bf16.mxu0 %v202
    %743 = vmatpush1.bf16.msra.mxu0 %v201
    %744 = vmatprep.subr.bf16.mxu0 %v198
    %745 = vmatpush1.bf16.msra.mxu0 %v197
    %746 = vmatprep.subr.bf16.mxu0 %v194
    %747 = vmatpush1.bf16.msra.mxu0 %v193
    %748 = vmatprep.subr.bf16.mxu0 %v190
    %749 = vmatpush1.bf16.msra.mxu0 %v189
    %750 = vmatprep.subr.bf16.mxu0 %v186
    %751 = vmatpush1.bf16.msra.mxu0 %v185
    %752 = vmatprep.subr.bf16.mxu0 0
    %753 = vmatpush2.bf16.msra.mxu0 0
    %754 = vmatprep.subr.bf16.mxu0 0
    %755 = vmatpush2.bf16.msra.mxu0 0
    %756 = vmatprep.subr.bf16.mxu0 0
    %757 = vmatpush2.bf16.msra.mxu0 0
    %758 = vmatprep.subr.bf16.mxu0 0
    %759 = vmatpush2.bf16.msra.mxu0 0
    %760 = vmatprep.subr.bf16.mxu0 0
    %761 = vmatpush2.bf16.msra.mxu0 0
    %762 = vmatprep.subr.bf16.mxu0 0
    %763 = vmatpush2.bf16.msra.mxu0 0
    %764 = vmatprep.subr.bf16.mxu0 0
    %765 = vmatpush2.bf16.msra.mxu0 0
    %766 = vmatprep.subr.bf16.mxu0 0
    %767 = vmatpush2.bf16.msra.mxu0 0
    %768 = vmatprep.mubr.bf16.mxu0 0
    %769 = vmatmul.mubr.bf16.gmra.mxu0 %v735
    %v770 = vpop.f32.mrf.mxu0
    %v771 = vadd.f32 0.0, %v770
    %v772 = vpop.f32.mrf.mxu0
    %v773 = vadd.f32 0.0, %v772
    %v774 = vpop.f32.mrf.mxu0
    %v775 = vpop.f32.mrf.mxu0
    %776 = vdwg.mxu0
    %777 = vmatprep.subr.bf16.mxu0 %v216
    %778 = vmatpush1.bf16.msra.mxu0 %v215
    %779 = vmatprep.subr.bf16.mxu0 %v212
    %780 = vmatpush1.bf16.msra.mxu0 %v211
    %781 = vmatprep.subr.bf16.mxu0 %v208
    %782 = vmatpush1.bf16.msra.mxu0 %v207
    %783 = vmatprep.subr.bf16.mxu0 %v204
    %784 = vmatpush1.bf16.msra.mxu0 %v203
    %785 = vmatprep.subr.bf16.mxu0 %v200
    %786 = vmatpush1.bf16.msra.mxu0 %v199
    %787 = vmatprep.subr.bf16.mxu0 %v196
    %788 = vmatpush1.bf16.msra.mxu0 %v195
    %789 = vmatprep.subr.bf16.mxu0 %v192
    %790 = vmatpush1.bf16.msra.mxu0 %v191
    %791 = vmatprep.subr.bf16.mxu0 %v188
    %792 = vmatpush1.bf16.msra.mxu0 %v187
    %793 = vmatprep.subr.bf16.mxu0 0
    %794 = vmatpush2.bf16.msra.mxu0 0
    %795 = vmatprep.subr.bf16.mxu0 0
    %796 = vmatpush2.bf16.msra.mxu0 0
    %797 = vmatprep.subr.bf16.mxu0 0
    %798 = vmatpush2.bf16.msra.mxu0 0
    %799 = vmatprep.subr.bf16.mxu0 0
    %800 = vmatpush2.bf16.msra.mxu0 0
    %801 = vmatprep.subr.bf16.mxu0 0
    %802 = vmatpush2.bf16.msra.mxu0 0
    %803 = vmatprep.subr.bf16.mxu0 0
    %804 = vmatpush2.bf16.msra.mxu0 0
    %805 = vmatprep.subr.bf16.mxu0 0
    %806 = vmatpush2.bf16.msra.mxu0 0
    %807 = vmatprep.subr.bf16.mxu0 0
    %808 = vmatpush2.bf16.msra.mxu0 0
    %809 = vmatprep.mubr.bf16.mxu0 0
    %810 = vmatmul.mubr.bf16.gmra.mxu0 %v735
    %v811 = vpop.f32.mrf.mxu0
    %v812 = vadd.f32 0.0, %v811
    %v813 = vpop.f32.mrf.mxu0
    %v814 = vadd.f32 0.0, %v813
    %v815 = vpop.f32.mrf.mxu0
    %v816 = vpop.f32.mrf.mxu0
    %817 = vdwg.mxu0
    %v818 = vadd.f32 %v731, %v771
    %v819 = vadd.f32 %v732, %v773
    %v820 = vadd.f32 %v733, %v812
    %v821 = vadd.f32 %v734, %v814
    %v822 = vxor.u32 %v818, 2147483648
    %v823 = vmul.f32 %v822, 1.442695
    %v824 = vpow.pop %v823
    %v825 = vadd.f32 %v824, 1.0
    %v826 = vrcp.pop %v825
    %v827 = vmul.f32 1.0, %v826
    %v828 = vxor.u32 %v819, 2147483648
    %v829 = vmul.f32 %v828, 1.442695
    %v830 = vpow.pop %v829
    %v831 = vadd.f32 %v830, 1.0
    %v832 = vrcp.pop %v831
    %v833 = vmul.f32 1.0, %v832
    %v834 = vtanh.pop %v820
    %v835 = vxor.u32 %v821, 2147483648
    %v836 = vmul.f32 %v835, 1.442695
    %v837 = vpow.pop %v836
    %v838 = vadd.f32 %v837, 1.0
    %v839 = vrcp.pop %v838
    %v840 = vmul.f32 1.0, %v839
    %v841 = vmul.f32 %v833, %v729
    %v842 = vmul.f32 %v827, %v834
    %v843 = vadd.f32 %v841, %v842
    %v844 = vtanh.pop %v843
    %v845 = vmul.f32 %v840, %v844
    %846 = vst [vmem:[#allocation3] sm:$0xff] %v843
    %847 = vst [vmem:[#allocation2] sm:$0xff] %v845
    %s848 = scalar_lea.vmem [#allocation9], 32
    %849 = vst [vmem:[%s848] sm:$0xff] %v845
    %v850 = vld [vmem:[#allocation2] sm:$0xff]
    %v851 = vld [vmem:[#allocation3] sm:$0xff]
    %s852 = scalar_lea.vmem [#allocation4], 160
    %v853 = vld [vmem:[%s852] sm:$0xff]
    %v854 = vld [vmem:[%s852 + $0x8] sm:$0xff]
    %v855 = vld [vmem:[%s852 + $0x10] sm:$0xff]
    %v856 = vld [vmem:[%s852 + $0x18] sm:$0xff]
    %v857 = vpack.c.bf16 %v850, %v850
    %858 = vmatprep.subr.bf16.mxu0 %v214
    %859 = vmatpush1.bf16.msra.mxu0 %v213
    %860 = vmatprep.subr.bf16.mxu0 %v210
    %861 = vmatpush1.bf16.msra.mxu0 %v209
    %862 = vmatprep.subr.bf16.mxu0 %v206
    %863 = vmatpush1.bf16.msra.mxu0 %v205
    %864 = vmatprep.subr.bf16.mxu0 %v202
    %865 = vmatpush1.bf16.msra.mxu0 %v201
    %866 = vmatprep.subr.bf16.mxu0 %v198
    %867 = vmatpush1.bf16.msra.mxu0 %v197
    %868 = vmatprep.subr.bf16.mxu0 %v194
    %869 = vmatpush1.bf16.msra.mxu0 %v193
    %870 = vmatprep.subr.bf16.mxu0 %v190
    %871 = vmatpush1.bf16.msra.mxu0 %v189
    %872 = vmatprep.subr.bf16.mxu0 %v186
    %873 = vmatpush1.bf16.msra.mxu0 %v185
    %874 = vmatprep.subr.bf16.mxu0 0
    %875 = vmatpush2.bf16.msra.mxu0 0
    %876 = vmatprep.subr.bf16.mxu0 0
    %877 = vmatpush2.bf16.msra.mxu0 0
    %878 = vmatprep.subr.bf16.mxu0 0
    %879 = vmatpush2.bf16.msra.mxu0 0
    %880 = vmatprep.subr.bf16.mxu0 0
    %881 = vmatpush2.bf16.msra.mxu0 0
    %882 = vmatprep.subr.bf16.mxu0 0
    %883 = vmatpush2.bf16.msra.mxu0 0
    %884 = vmatprep.subr.bf16.mxu0 0
    %885 = vmatpush2.bf16.msra.mxu0 0
    %886 = vmatprep.subr.bf16.mxu0 0
    %887 = vmatpush2.bf16.msra.mxu0 0
    %888 = vmatprep.subr.bf16.mxu0 0
    %889 = vmatpush2.bf16.msra.mxu0 0
    %890 = vmatprep.mubr.bf16.mxu0 0
    %891 = vmatmul.mubr.bf16.gmra.mxu0 %v857
    %v892 = vpop.f32.mrf.mxu0
    %v893 = vadd.f32 0.0, %v892
    %v894 = vpop.f32.mrf.mxu0
    %v895 = vadd.f32 0.0, %v894
    %v896 = vpop.f32.mrf.mxu0
    %v897 = vpop.f32.mrf.mxu0
    %898 = vdwg.mxu0
    %899 = vmatprep.subr.bf16.mxu0 %v216
    %900 = vmatpush1.bf16.msra.mxu0 %v215
    %901 = vmatprep.subr.bf16.mxu0 %v212
    %902 = vmatpush1.bf16.msra.mxu0 %v211
    %903 = vmatprep.subr.bf16.mxu0 %v208
    %904 = vmatpush1.bf16.msra.mxu0 %v207
    %905 = vmatprep.subr.bf16.mxu0 %v204
    %906 = vmatpush1.bf16.msra.mxu0 %v203
    %907 = vmatprep.subr.bf16.mxu0 %v200
    %908 = vmatpush1.bf16.msra.mxu0 %v199
    %909 = vmatprep.subr.bf16.mxu0 %v196
    %910 = vmatpush1.bf16.msra.mxu0 %v195
    %911 = vmatprep.subr.bf16.mxu0 %v192
    %912 = vmatpush1.bf16.msra.mxu0 %v191
    %913 = vmatprep.subr.bf16.mxu0 %v188
    %914 = vmatpush1.bf16.msra.mxu0 %v187
    %915 = vmatprep.subr.bf16.mxu0 0
    %916 = vmatpush2.bf16.msra.mxu0 0
    %917 = vmatprep.subr.bf16.mxu0 0
    %918 = vmatpush2.bf16.msra.mxu0 0
    %919 = vmatprep.subr.bf16.mxu0 0
    %920 = vmatpush2.bf16.msra.mxu0 0
    %921 = vmatprep.subr.bf16.mxu0 0
    %922 = vmatpush2.bf16.msra.mxu0 0
    %923 = vmatprep.subr.bf16.mxu0 0
    %924 = vmatpush2.bf16.msra.mxu0 0
    %925 = vmatprep.subr.bf16.mxu0 0
    %926 = vmatpush2.bf16.msra.mxu0 0
    %927 = vmatprep.subr.bf16.mxu0 0
    %928 = vmatpush2.bf16.msra.mxu0 0
    %929 = vmatprep.subr.bf16.mxu0 0
    %930 = vmatpush2.bf16.msra.mxu0 0
    %931 = vmatprep.mubr.bf16.mxu0 0
    %932 = vmatmul.mubr.bf16.gmra.mxu0 %v857
    %v933 = vpop.f32.mrf.mxu0
    %v934 = vadd.f32 0.0, %v933
    %v935 = vpop.f32.mrf.mxu0
    %v936 = vadd.f32 0.0, %v935
    %v937 = vpop.f32.mrf.mxu0
    %v938 = vpop.f32.mrf.mxu0
    %939 = vdwg.mxu0
    %v940 = vadd.f32 %v853, %v893
    %v941 = vadd.f32 %v854, %v895
    %v942 = vadd.f32 %v855, %v934
    %v943 = vadd.f32 %v856, %v936
    %v944 = vxor.u32 %v940, 2147483648
    %v945 = vmul.f32 %v944, 1.442695
    %v946 = vpow.pop %v945
    %v947 = vadd.f32 %v946, 1.0
    %v948 = vrcp.pop %v947
    %v949 = vmul.f32 1.0, %v948
    %v950 = vxor.u32 %v941, 2147483648
    %v951 = vmul.f32 %v950, 1.442695
    %v952 = vpow.pop %v951
    %v953 = vadd.f32 %v952, 1.0
    %v954 = vrcp.pop %v953
    %v955 = vmul.f32 1.0, %v954
    %v956 = vtanh.pop %v942
    %v957 = vxor.u32 %v943, 2147483648
    %v958 = vmul.f32 %v957, 1.442695
    %v959 = vpow.pop %v958
    %v960 = vadd.f32 %v959, 1.0
    %v961 = vrcp.pop %v960
    %v962 = vmul.f32 1.0, %v961
    %v963 = vmul.f32 %v955, %v851
    %v964 = vmul.f32 %v949, %v956
    %v965 = vadd.f32 %v963, %v964
    %v966 = vtanh.pop %v965
    %v967 = vmul.f32 %v962, %v966
    %968 = vst [vmem:[#allocation3] sm:$0xff] %v965
    %969 = vst [vmem:[#allocation2] sm:$0xff] %v967
    %s970 = scalar_lea.vmem [#allocation9], 40
    %971 = vst [vmem:[%s970] sm:$0xff] %v967
    %v972 = vld [vmem:[#allocation2] sm:$0xff]
    %v973 = vld [vmem:[#allocation3] sm:$0xff]
    %s974 = scalar_lea.vmem [#allocation4], 192
    %v975 = vld [vmem:[%s974] sm:$0xff]
    %v976 = vld [vmem:[%s974 + $0x8] sm:$0xff]
    %v977 = vld [vmem:[%s974 + $0x10] sm:$0xff]
    %v978 = vld [vmem:[%s974 + $0x18] sm:$0xff]
    %v979 = vpack.c.bf16 %v972, %v972
    %980 = vmatprep.subr.bf16.mxu0 %v214
    %981 = vmatpush1.bf16.msra.mxu0 %v213
    %982 = vmatprep.subr.bf16.mxu0 %v210
    %983 = vmatpush1.bf16.msra.mxu0 %v209
    %984 = vmatprep.subr.bf16.mxu0 %v206
    %985 = vmatpush1.bf16.msra.mxu0 %v205
    %986 = vmatprep.subr.bf16.mxu0 %v202
    %987 = vmatpush1.bf16.msra.mxu0 %v201
    %988 = vmatprep.subr.bf16.mxu0 %v198
    %989 = vmatpush1.bf16.msra.mxu0 %v197
    %990 = vmatprep.subr.bf16.mxu0 %v194
    %991 = vmatpush1.bf16.msra.mxu0 %v193
    %992 = vmatprep.subr.bf16.mxu0 %v190
    %993 = vmatpush1.bf16.msra.mxu0 %v189
    %994 = vmatprep.subr.bf16.mxu0 %v186
    %995 = vmatpush1.bf16.msra.mxu0 %v185
    %996 = vmatprep.subr.bf16.mxu0 0
    %997 = vmatpush2.bf16.msra.mxu0 0
    %998 = vmatprep.subr.bf16.mxu0 0
    %999 = vmatpush2.bf16.msra.mxu0 0
    %1000 = vmatprep.subr.bf16.mxu0 0
    %1001 = vmatpush2.bf16.msra.mxu0 0
    %1002 = vmatprep.subr.bf16.mxu0 0
    %1003 = vmatpush2.bf16.msra.mxu0 0
    %1004 = vmatprep.subr.bf16.mxu0 0
    %1005 = vmatpush2.bf16.msra.mxu0 0
    %1006 = vmatprep.subr.bf16.mxu0 0
    %1007 = vmatpush2.bf16.msra.mxu0 0
    %1008 = vmatprep.subr.bf16.mxu0 0
    %1009 = vmatpush2.bf16.msra.mxu0 0
    %1010 = vmatprep.subr.bf16.mxu0 0
    %1011 = vmatpush2.bf16.msra.mxu0 0
    %1012 = vmatprep.mubr.bf16.mxu0 0
    %1013 = vmatmul.mubr.bf16.gmra.mxu0 %v979
    %v1014 = vpop.f32.mrf.mxu0
    %v1015 = vadd.f32 0.0, %v1014
    %v1016 = vpop.f32.mrf.mxu0
    %v1017 = vadd.f32 0.0, %v1016
    %v1018 = vpop.f32.mrf.mxu0
    %v1019 = vpop.f32.mrf.mxu0
    %1020 = vdwg.mxu0
    %1021 = vmatprep.subr.bf16.mxu0 %v216
    %1022 = vmatpush1.bf16.msra.mxu0 %v215
    %1023 = vmatprep.subr.bf16.mxu0 %v212
    %1024 = vmatpush1.bf16.msra.mxu0 %v211
    %1025 = vmatprep.subr.bf16.mxu0 %v208
    %1026 = vmatpush1.bf16.msra.mxu0 %v207
    %1027 = vmatprep.subr.bf16.mxu0 %v204
    %1028 = vmatpush1.bf16.msra.mxu0 %v203
    %1029 = vmatprep.subr.bf16.mxu0 %v200
    %1030 = vmatpush1.bf16.msra.mxu0 %v199
    %1031 = vmatprep.subr.bf16.mxu0 %v196
    %1032 = vmatpush1.bf16.msra.mxu0 %v195
    %1033 = vmatprep.subr.bf16.mxu0 %v192
    %1034 = vmatpush1.bf16.msra.mxu0 %v191
    %1035 = vmatprep.subr.bf16.mxu0 %v188
    %1036 = vmatpush1.bf16.msra.mxu0 %v187
    %1037 = vmatprep.subr.bf16.mxu0 0
    %1038 = vmatpush2.bf16.msra.mxu0 0
    %1039 = vmatprep.subr.bf16.mxu0 0
    %1040 = vmatpush2.bf16.msra.mxu0 0
    %1041 = vmatprep.subr.bf16.mxu0 0
    %1042 = vmatpush2.bf16.msra.mxu0 0
    %1043 = vmatprep.subr.bf16.mxu0 0
    %1044 = vmatpush2.bf16.msra.mxu0 0
    %1045 = vmatprep.subr.bf16.mxu0 0
    %1046 = vmatpush2.bf16.msra.mxu0 0
    %1047 = vmatprep.subr.bf16.mxu0 0
    %1048 = vmatpush2.bf16.msra.mxu0 0
    %1049 = vmatprep.subr.bf16.mxu0 0
    %1050 = vmatpush2.bf16.msra.mxu0 0
    %1051 = vmatprep.subr.bf16.mxu0 0
    %1052 = vmatpush2.bf16.msra.mxu0 0
    %1053 = vmatprep.mubr.bf16.mxu0 0
    %1054 = vmatmul.mubr.bf16.gmra.mxu0 %v979
    %v1055 = vpop.f32.mrf.mxu0
    %v1056 = vadd.f32 0.0, %v1055
    %v1057 = vpop.f32.mrf.mxu0
    %v1058 = vadd.f32 0.0, %v1057
    %v1059 = vpop.f32.mrf.mxu0
    %v1060 = vpop.f32.mrf.mxu0
    %1061 = vdwg.mxu0
    %v1062 = vadd.f32 %v975, %v1015
    %v1063 = vadd.f32 %v976, %v1017
    %v1064 = vadd.f32 %v977, %v1056
    %v1065 = vadd.f32 %v978, %v1058
    %v1066 = vxor.u32 %v1062, 2147483648
    %v1067 = vmul.f32 %v1066, 1.442695
    %v1068 = vpow.pop %v1067
    %v1069 = vadd.f32 %v1068, 1.0
    %v1070 = vrcp.pop %v1069
    %v1071 = vmul.f32 1.0, %v1070
    %v1072 = vxor.u32 %v1063, 2147483648
    %v1073 = vmul.f32 %v1072, 1.442695
    %v1074 = vpow.pop %v1073
    %v1075 = vadd.f32 %v1074, 1.0
    %v1076 = vrcp.pop %v1075
    %v1077 = vmul.f32 1.0, %v1076
    %v1078 = vtanh.pop %v1064
    %v1079 = vxor.u32 %v1065, 2147483648
    %v1080 = vmul.f32 %v1079, 1.442695
    %v1081 = vpow.pop %v1080
    %v1082 = vadd.f32 %v1081, 1.0
    %v1083 = vrcp.pop %v1082
    %v1084 = vmul.f32 1.0, %v1083
    %v1085 = vmul.f32 %v1077, %v973
    %v1086 = vmul.f32 %v1071, %v1078
    %v1087 = vadd.f32 %v1085, %v1086
    %v1088 = vtanh.pop %v1087
    %v1089 = vmul.f32 %v1084, %v1088
    %1090 = vst [vmem:[#allocation3] sm:$0xff] %v1087
    %1091 = vst [vmem:[#allocation2] sm:$0xff] %v1089
    %s1092 = scalar_lea.vmem [#allocation9], 48
    %1093 = vst [vmem:[%s1092] sm:$0xff] %v1089
    %v1094 = vld [vmem:[#allocation2] sm:$0xff]
    %v1095 = vld [vmem:[#allocation3] sm:$0xff]
    %s1096 = scalar_lea.vmem [#allocation4], 224
    %v1097 = vld [vmem:[%s1096] sm:$0xff]
    %v1098 = vld [vmem:[%s1096 + $0x8] sm:$0xff]
    %v1099 = vld [vmem:[%s1096 + $0x10] sm:$0xff]
    %v1100 = vld [vmem:[%s1096 + $0x18] sm:$0xff]
    %v1101 = vpack.c.bf16 %v1094, %v1094
    %1102 = vmatprep.subr.bf16.mxu0 %v214
    %1103 = vmatpush1.bf16.msra.mxu0 %v213
    %1104 = vmatprep.subr.bf16.mxu0 %v210
    %1105 = vmatpush1.bf16.msra.mxu0 %v209
    %1106 = vmatprep.subr.bf16.mxu0 %v206
    %1107 = vmatpush1.bf16.msra.mxu0 %v205
    %1108 = vmatprep.subr.bf16.mxu0 %v202
    %1109 = vmatpush1.bf16.msra.mxu0 %v201
    %1110 = vmatprep.subr.bf16.mxu0 %v198
    %1111 = vmatpush1.bf16.msra.mxu0 %v197
    %1112 = vmatprep.subr.bf16.mxu0 %v194
    %1113 = vmatpush1.bf16.msra.mxu0 %v193
    %1114 = vmatprep.subr.bf16.mxu0 %v190
    %1115 = vmatpush1.bf16.msra.mxu0 %v189
    %1116 = vmatprep.subr.bf16.mxu0 %v186
    %1117 = vmatpush1.bf16.msra.mxu0 %v185
    %1118 = vmatprep.subr.bf16.mxu0 0
    %1119 = vmatpush2.bf16.msra.mxu0 0
    %1120 = vmatprep.subr.bf16.mxu0 0
    %1121 = vmatpush2.bf16.msra.mxu0 0
    %1122 = vmatprep.subr.bf16.mxu0 0
    %1123 = vmatpush2.bf16.msra.mxu0 0
    %1124 = vmatprep.subr.bf16.mxu0 0
    %1125 = vmatpush2.bf16.msra.mxu0 0
    %1126 = vmatprep.subr.bf16.mxu0 0
    %1127 = vmatpush2.bf16.msra.mxu0 0
    %1128 = vmatprep.subr.bf16.mxu0 0
    %1129 = vmatpush2.bf16.msra.mxu0 0
    %1130 = vmatprep.subr.bf16.mxu0 0
    %1131 = vmatpush2.bf16.msra.mxu0 0
    %1132 = vmatprep.subr.bf16.mxu0 0
    %1133 = vmatpush2.bf16.msra.mxu0 0
    %1134 = vmatprep.mubr.bf16.mxu0 0
    %1135 = vmatmul.mubr.bf16.gmra.mxu0 %v1101
    %v1136 = vpop.f32.mrf.mxu0
    %v1137 = vadd.f32 0.0, %v1136
    %v1138 = vpop.f32.mrf.mxu0
    %v1139 = vadd.f32 0.0, %v1138
    %v1140 = vpop.f32.mrf.mxu0
    %v1141 = vpop.f32.mrf.mxu0
    %1142 = vdwg.mxu0
    %1143 = vmatprep.subr.bf16.mxu0 %v216
    %1144 = vmatpush1.bf16.msra.mxu0 %v215
    %1145 = vmatprep.subr.bf16.mxu0 %v212
    %1146 = vmatpush1.bf16.msra.mxu0 %v211
    %1147 = vmatprep.subr.bf16.mxu0 %v208
    %1148 = vmatpush1.bf16.msra.mxu0 %v207
    %1149 = vmatprep.subr.bf16.mxu0 %v204
    %1150 = vmatpush1.bf16.msra.mxu0 %v203
    %1151 = vmatprep.subr.bf16.mxu0 %v200
    %1152 = vmatpush1.bf16.msra.mxu0 %v199
    %1153 = vmatprep.subr.bf16.mxu0 %v196
    %1154 = vmatpush1.bf16.msra.mxu0 %v195
    %1155 = vmatprep.subr.bf16.mxu0 %v192
    %1156 = vmatpush1.bf16.msra.mxu0 %v191
    %1157 = vmatprep.subr.bf16.mxu0 %v188
    %1158 = vmatpush1.bf16.msra.mxu0 %v187
    %1159 = vmatprep.subr.bf16.mxu0 0
    %1160 = vmatpush2.bf16.msra.mxu0 0
    %1161 = vmatprep.subr.bf16.mxu0 0
    %1162 = vmatpush2.bf16.msra.mxu0 0
    %1163 = vmatprep.subr.bf16.mxu0 0
    %1164 = vmatpush2.bf16.msra.mxu0 0
    %1165 = vmatprep.subr.bf16.mxu0 0
    %1166 = vmatpush2.bf16.msra.mxu0 0
    %1167 = vmatprep.subr.bf16.mxu0 0
    %1168 = vmatpush2.bf16.msra.mxu0 0
    %1169 = vmatprep.subr.bf16.mxu0 0
    %1170 = vmatpush2.bf16.msra.mxu0 0
    %1171 = vmatprep.subr.bf16.mxu0 0
    %1172 = vmatpush2.bf16.msra.mxu0 0
    %1173 = vmatprep.subr.bf16.mxu0 0
    %1174 = vmatpush2.bf16.msra.mxu0 0
    %1175 = vmatprep.mubr.bf16.mxu0 0
    %1176 = vmatmul.mubr.bf16.gmra.mxu0 %v1101
    %v1177 = vpop.f32.mrf.mxu0
    %v1178 = vadd.f32 0.0, %v1177
    %v1179 = vpop.f32.mrf.mxu0
    %v1180 = vadd.f32 0.0, %v1179
    %v1181 = vpop.f32.mrf.mxu0
    %v1182 = vpop.f32.mrf.mxu0
    %1183 = vdwg.mxu0
    %v1184 = vadd.f32 %v1097, %v1137
    %v1185 = vadd.f32 %v1098, %v1139
    %v1186 = vadd.f32 %v1099, %v1178
    %v1187 = vadd.f32 %v1100, %v1180
    %v1188 = vxor.u32 %v1184, 2147483648
    %v1189 = vmul.f32 %v1188, 1.442695
    %v1190 = vpow.pop %v1189
    %v1191 = vadd.f32 %v1190, 1.0
    %v1192 = vrcp.pop %v1191
    %v1193 = vmul.f32 1.0, %v1192
    %v1194 = vxor.u32 %v1185, 2147483648
    %v1195 = vmul.f32 %v1194, 1.442695
    %v1196 = vpow.pop %v1195
    %v1197 = vadd.f32 %v1196, 1.0
    %v1198 = vrcp.pop %v1197
    %v1199 = vmul.f32 1.0, %v1198
    %v1200 = vtanh.pop %v1186
    %v1201 = vxor.u32 %v1187, 2147483648
    %v1202 = vmul.f32 %v1201, 1.442695
    %v1203 = vpow.pop %v1202
    %v1204 = vadd.f32 %v1203, 1.0
    %v1205 = vrcp.pop %v1204
    %v1206 = vmul.f32 1.0, %v1205
    %v1207 = vmul.f32 %v1199, %v1095
    %v1208 = vmul.f32 %v1193, %v1200
    %v1209 = vadd.f32 %v1207, %v1208
    %v1210 = vtanh.pop %v1209
    %v1211 = vmul.f32 %v1206, %v1210
    %1212 = vst [vmem:[#allocation3] sm:$0xff] %v1209
    %1213 = vst [vmem:[#allocation2] sm:$0xff] %v1211
    %s1214 = scalar_lea.vmem [#allocation9], 56
    %1215 = vst [vmem:[%s1214] sm:$0xff] %v1211
    // Predicated region
    $region22: #{tpu_custom_call.1} parent=1 // pred_check
      %p1216 = pneg %p44
    $region23: #{tpu_custom_call.1} parent=1 // pred_check_branch
      %1218 = sbr.rel (%p1216) target = $region25
    $region24: #{tpu_custom_call.1} parent=1 // pred_region
      %v1219 = vld [vmem:[#allocation3] sm:$0xff]
      %1220 = vst [vmem:[#allocation10] sm:$0xff] %v1219
    $region25: #{tpu_custom_call.1} parent=1 // pred_fallthru
      _
    // Predicated region
    $region26: #{tpu_custom_call.1} parent=1 // pred_check
      _
    $region27: #{tpu_custom_call.1} parent=1 // pred_check_branch
      %1222 = sbr.rel (0) target = $region29
    $region28: #{tpu_custom_call.1} parent=1 // pred_region
      %s1224 = ssub.s32 1024, 1024
      %1225 = vsyncadd [#allocation6], %s1224
      %s1226 = sshll.u32 [#allocation9], 4
      %s1227 = int_to_ptr.vmem [resolvable:$true] %s1226
      %1232 = dma.vmem_to_hbm [thread:$0]  %s1227, 1024, %s2, [#allocation6], 128, 128, 8
    $region29: #{tpu_custom_call.1} parent=1 // pred_fallthru
      _
    // Predicated region
    $region30: #{tpu_custom_call.1} parent=1 // pred_check
      _
    $region31: #{tpu_custom_call.1} parent=1 // pred_check_branch
      %1234 = sbr.rel (0) target = $region33
    $region32: #{tpu_custom_call.1} parent=1 // pred_region
      %s1236 = ssub.s32 128, 128
      %1237 = vsyncadd [#allocation11], %s1236
      %s1239 = sshll.u32 [#allocation10], 4
      %s1240 = int_to_ptr.vmem [resolvable:$true] %s1239
      %1242 = dma.vmem_to_hbm [thread:$0]  %s1240, 128, %s3, [#allocation11]
    $region33: #{tpu_custom_call.1} parent=1 // pred_fallthru
      _
    // Predicated region
    $region34: #{tpu_custom_call.1} parent=1 // pred_check
      _
    $region35: #{tpu_custom_call.1} parent=1 // pred_check_branch
      %1244 = sbr.rel (0) target = $region37
    $region36: #{tpu_custom_call.1} parent=1 // pred_region
      %1245 = dma.done [#allocation6], 1024
    $region37: #{tpu_custom_call.1} parent=1 // pred_fallthru
      _
    // Predicated region
    $region38: #{tpu_custom_call.1} parent=1 // pred_check
      _
    $region39: #{tpu_custom_call.1} parent=1 // pred_check_branch
      %1247 = sbr.rel (0) target = $region41
    $region40: #{tpu_custom_call.1} parent=1 // pred_region
      %1248 = dma.done [#allocation11], 128
    $region41: #{tpu_custom_call.1} parent=1 // pred_fallthru
      _
    %1249 = vsyncpa [#allocation5], 1
    %1250 = vsyncpa [#allocation8], 1
    %1251 = vsyncpa [#allocation6], 1
    %1252 = vsyncpa [#allocation11], 1

</llo_original>
